<compile_context>
chip_gen: v7x
topology: tpu7x:2x2x1
jax: 0.10.0
libtpu: 0.0.40
codegen_flags: <defaults>
</compile_context>

<pallas_src>
import functools

import jax
import jax.numpy as jnp
from jax import lax
from jax.experimental import pallas as pl
from jax.experimental.pallas import tpu as pltpu


def _round_up(v, m):
    return -(-v // m) * m


def _inv_res_kernel(has_expand, use_res, stride, W, Wo, th_out, n_tail, *refs):
    it = iter(refs)
    x_ref = next(it)                           # (Hpad, W, Cin) bf16 (expand) / f32
    if has_expand:
        w1_ref = next(it)                      # (Cin, hid)  bf16 (BN scale folded)
        b1_ref = next(it)                      # (1, hid)    f32
    wd_ref = next(it)                          # (3, 3, hid) f32  (BN scale folded)
    b2_ref = next(it)                          # (1, hid)    f32
    w2t_ref = next(it)                         # (Cout, hid) bf16 (BN scale folded)
    b3_ref = next(it)                          # (Cout, 1)   f32
    o_ref = next(it)                           # (Cout, th_out*Wo)
    pad_ref = next(it)                         # (th_in+2, Wc, hid) f32 scratch

    th_in = th_out * stride
    hid = wd_ref.shape[-1]
    cin = x_ref.shape[-1]
    Wc = pad_ref.shape[1]

    r = pl.program_id(1)
    row0 = pl.multiple_of(r * th_in, th_in)

    # Rows of this tile incl. the 1-row halo (x is zero-padded along H).
    x_halo = x_ref[pl.ds(row0, th_in + 2), :, :]

    # ---- expand: 1x1 conv (bf16 MXU, f32 acc) + bias + ReLU6 -----------------
    if has_expand:
        mh = (th_in + 2) * W
        # NOTE: reshape is layout-preserving when W % 8 == 0.
        t = jnp.dot(x_halo.reshape(mh, cin), w1_ref[...],
                    preferred_element_type=jnp.float32)
        t = jnp.clip(t + b1_ref[...], 0.0, 6.0).reshape(th_in + 2, W, hid)
    else:
        t = x_halo                             # f32

    # ---- depthwise 3x3 zero-pad scratch --------------------------------------
    # Interior stored at sublane-aligned column 8 -> unmasked big store;
    # 1-wide zero borders at columns 7 and 8+W.
    pad_ref[:, pl.ds(8, W), :] = t
    zc = jnp.zeros((th_in + 2, 1, hid), jnp.float32)
    pad_ref[:, pl.ds(7, 1), :] = zc
    pad_ref[:, pl.ds(8 + W, 1), :] = zc

    # Zero-padding along H: only the boundary row tiles have halo rows outside
    # the real image; zero just those rows (interior tiles skip this entirely).
    @pl.when(r == 0)
    def _():
        pad_ref[pl.ds(0, 1), :, :] = jnp.zeros((1, Wc, hid), jnp.float32)

    @pl.when(r == pl.num_programs(1) - 1)
    def _():
        pad_ref[pl.ds(th_in + 2 - n_tail, n_tail), :, :] = jnp.zeros(
            (n_tail, Wc, hid), jnp.float32)

    # ---- depthwise 3x3 (stride s) + bias + ReLU6 ------------------------------
    acc = jnp.zeros((th_out, Wo, hid), jnp.float32)
    if stride == 1:
        # One column window per dj; the 3 row taps are cheap leading-dim slices.
        for dj in range(3):
            cw = pad_ref[:, pl.ds(7 + dj, Wo), :]
            for di in range(3):
                acc = acc + cw[di:di + th_out] * wd_ref[di, dj, :].reshape(1, 1, hid)
    else:
        # Deinterleave columns once per row-tap: E = even pad cols, O = odd.
        # dj=0 -> E[j], dj=1 -> O[j], dj=2 -> E[j+1]  (all unit-offset slices).
        for di in range(3):
            rE = pad_ref[pl.ds(di, th_out, stride=2), pl.ds(7, Wo + 1, stride=2), :]
            rO = pad_ref[pl.ds(di, th_out, stride=2), pl.ds(8, Wo, stride=2), :]
            acc = acc + rE[:, :Wo, :] * wd_ref[di, 0, :].reshape(1, 1, hid)
            acc = acc + rO * wd_ref[di, 1, :].reshape(1, 1, hid)
            acc = acc + rE[:, 1:, :] * wd_ref[di, 2, :].reshape(1, 1, hid)

    t2 = jnp.clip(acc + b2_ref[...].reshape(1, 1, hid), 0.0, 6.0)

    # ---- project: 1x1 conv (bf16 MXU), lane-dense (Cout, pixels) output ------
    m = th_out * Wo
    t2m = t2.reshape(m, hid).astype(jnp.bfloat16)       # Wo % 8 == 0 -> free reshape
    y = lax.dot_general(w2t_ref[...], t2m, (((1,), (1,)), ((), ())),
                        preferred_element_type=jnp.float32)       # (Cout, m)
    y = y + b3_ref[...]

    if use_res:
        # Residual from the already-resident x block (no second HBM stream).
        xr = x_halo[1:1 + th_out].reshape(m, cin).astype(jnp.float32)
        y = y + xr.T                                     # XLU transpose, idle unit

    o_ref[...] = y.astype(o_ref.dtype)


def _vmem_limit_bytes():
    """~3/4 of physical VMEM, capped at 96 MiB (=> ~48 MiB on v7x's 64 MiB)."""
    cap = 64 * 1024 * 1024
    try:
        cap = int(getattr(pltpu.get_tpu_info(), "vmem_capacity_bytes", cap))
    except Exception:
        pass
    return int(min(cap * 3 // 4, 96 * 1024 * 1024))


def _pick_row_tile(Ho, Wo, W, Wc, cin, hid, cout, stride, x_bytes, budget):
    """Largest divisor of Ho whose per-tile VMEM footprint fits `budget`."""
    def lane(c):
        return _round_up(c, 128)

    def sub(c):
        return _round_up(c, 8)

    for th in range(Ho, 0, -1):
        if Ho % th:
            continue
        th_in = th * stride
        hpad = (Ho // th) * th_in + 2
        m = th * Wo
        fp = (th_in + 2) * sub(Wc) * lane(hid) * 4          # pad_ref scratch
        fp += (th_in + 2) * sub(W) * lane(hid) * 4          # expand output t
        fp += 2 * th * sub(Wo) * lane(hid) * 4              # acc / t2 temporaries
        fp += 2 * hpad * sub(W) * lane(cin) * x_bytes       # x block (double buf)
        fp += 2 * sub(cout) * lane(m) * 4                   # out block (double buf)
        if fp <= budget:
            return th
    return 1


def inverted_residual_pallas(x_nchw, params, *, stride, expand_ratio):
    assert stride in (1, 2)
    N, Cin, H, W = x_nchw.shape
    hidden, Cout = params["w2"].shape
    has_expand = expand_ratio != 1
    use_res = (stride == 1) and (Cin == Cout)
    Ho = (H - 1) // stride + 1
    Wo = (W - 1) // stride + 1

    f32, bf16 = jnp.float32, jnp.bfloat16
    xdt = bf16 if has_expand else f32       # bf16 x only feeds the MXU

    vmem_limit = _vmem_limit_bytes()
    Wc = _round_up(W + 9, 8)                # aligned interior at col 8 + halo cols
    th_out = _pick_row_tile(Ho, Wo, W, Wc, Cin, hidden, Cout, stride,
                            jnp.dtype(xdt).itemsize, budget=vmem_limit // 2)
    R = Ho // th_out
    th_in = th_out * stride
    m = th_out * Wo
    n_tail = R * th_in + 1 - H              # trailing pad rows in the last tile
    Hpad = R * th_in + 2

    # Single fused transpose+cast+pad of the input (no separate residual copy).
    x_nhwc = jnp.transpose(x_nchw, (0, 2, 3, 1)).astype(xdt)
    x_pad = jnp.pad(x_nhwc, ((0, 0), (1, Hpad - H - 1), (0, 0), (0, 0)))

    args = [x_pad]
    in_specs = [pl.BlockSpec((None, Hpad, W, Cin), lambda n, r: (n, 0, 0, 0))]

    def const_spec(a):
        nd = a.ndim
        return pl.BlockSpec(a.shape, lambda n, r, _nd=nd: (0,) * _nd)

    # Fold BatchNorm scales into the conv weights; keep biases separate (f32).
    if has_expand:
        w1p = (params["w1"] * params["s1"]).astype(bf16)             # (Cin, hid)
        b1 = params["b1"].astype(f32)                                # (1, hid)
        args += [w1p, b1]
        in_specs += [const_spec(w1p), const_spec(b1)]

    wdp = (params["wd"] * params["s2"].reshape(1, 1, hidden)).astype(f32)
    b2 = params["b2"].astype(f32)
    w2t = (params["w2"] * params["s3"]).T.astype(bf16)               # (Cout, hid)
    b3 = params["b3"].reshape(Cout, 1).astype(f32)
    args += [wdp, b2, w2t, b3]
    in_specs += [const_spec(wdp), const_spec(b2), const_spec(w2t), const_spec(b3)]

    kernel = functools.partial(_inv_res_kernel, has_expand, use_res, stride,
                               W, Wo, th_out, n_tail)

    y = pl.pallas_call(
        kernel,
        out_shape=jax.ShapeDtypeStruct((N, R, Cout, m), x_nchw.dtype),
        grid_spec=pltpu.PrefetchScalarGridSpec(
            num_scalar_prefetch=0,
            grid=(N, R),
            in_specs=in_specs,
            out_specs=pl.BlockSpec((None, None, Cout, m),
                                   lambda n, r: (n, r, 0, 0)),
            scratch_shapes=[pltpu.VMEM((th_in + 2, Wc, hidden), jnp.float32)],
        ),
        compiler_params=pltpu.CompilerParams(
            dimension_semantics=("parallel", "parallel"),
            vmem_limit_bytes=vmem_limit,
        ),
    )(*args)

    # (N, R, Cout, th_out*Wo) -> (N, Cout, Ho, Wo)
    return jnp.transpose(y, (0, 2, 1, 3)).reshape(N, Cout, Ho, Wo)


def make_params(key, cin, cout, expand_ratio, eps=1e-5):
    """Deterministic synthetic weights; BN represented as (scale, bias)."""
    hidden = int(round(cin * expand_ratio))
    ks = jax.random.split(key, 16)

    def bn(k0, k1, k2, k3, c):
        gamma = jax.random.uniform(k0, (c,), jnp.float32, 0.5, 1.5)
        beta = 0.1 * jax.random.normal(k1, (c,), jnp.float32)
        mean = 0.1 * jax.random.normal(k2, (c,), jnp.float32)
        var = jax.random.uniform(k3, (c,), jnp.float32, 0.5, 1.5)
        scale = gamma / jnp.sqrt(var + eps)
        bias = beta - mean * scale
        return scale.reshape(1, c), bias.reshape(1, c)

    p = {}
    if expand_ratio != 1:
        p["w1"] = 0.1 * jax.random.normal(ks[0], (cin, hidden), jnp.float32)
        p["s1"], p["b1"] = bn(ks[1], ks[2], ks[3], ks[4], hidden)
    p["wd"] = 0.1 * jax.random.normal(ks[5], (3, 3, hidden), jnp.float32)
    p["s2"], p["b2"] = bn(ks[6], ks[7], ks[8], ks[9], hidden)
    p["w2"] = 0.1 * jax.random.normal(ks[10], (hidden, cout), jnp.float32)
    p["s3"], p["b3"] = bn(ks[11], ks[12], ks[13], ks[14], cout)
    return p


def inverted_residual_ref(x_nchw, params, *, stride, expand_ratio, mxu_dtype=None):
    """Pure-JAX reference.  If mxu_dtype is set, the 1x1-conv operands (and, when
    an expand conv exists, the residual input, mirroring the kernel's bf16 x) are
    rounded to that dtype; everything else is f32."""
    f32 = jnp.float32
    x = jnp.transpose(x_nchw, (0, 2, 3, 1)).astype(f32)
    cin = x.shape[-1]
    hidden, cout = params["w2"].shape
    dn = ("NHWC", "HWIO", "NHWC")

    def cast(a):
        return a if mxu_dtype is None else a.astype(mxu_dtype)

    h = x
    if expand_ratio != 1:
        w = params["w1"] * params["s1"]
        h = jax.lax.conv_general_dilated(cast(h), cast(w)[None, None], (1, 1),
                                         "VALID", dimension_numbers=dn,
                                         preferred_element_type=f32)
        h = jnp.clip(h + params["b1"][0], 0.0, 6.0)
    wdf = params["wd"] * params["s2"][0].reshape(1, 1, hidden)
    h = jax.lax.conv_general_dilated(h, wdf[:, :, None, :], (stride, stride),
                                     [(1, 1), (1, 1)], dimension_numbers=dn,
                                     feature_group_count=hidden,
                                     preferred_element_type=f32)
    h = jnp.clip(h + params["b2"][0], 0.0, 6.0)
    w = params["w2"] * params["s3"]
    h = jax.lax.conv_general_dilated(cast(h), cast(w)[None, None], (1, 1),
                                     "VALID", dimension_numbers=dn,
                                     preferred_element_type=f32)
    h = h + params["b3"][0]
    if stride == 1 and cin == cout:
        res = x
        if mxu_dtype is not None and expand_ratio != 1:
            res = x.astype(mxu_dtype).astype(f32)   # kernel ships x in bf16 here
        h = h + res
    return jnp.transpose(h, (0, 3, 1, 2))


if __name__ == "__main__":
    key = jax.random.PRNGKey(0)
    N, H, W = 2, 16, 16
    configs = [
        dict(cin=8, cout=8, stride=1, expand_ratio=6),    # residual, in-kernel add
        dict(cin=8, cout=16, stride=2, expand_ratio=6),   # strided depthwise
        dict(cin=8, cout=16, stride=1, expand_ratio=1),   # no expand conv
    ]
    for cfg in configs:
        key, kx, kp = jax.random.split(key, 3)
        x = jax.random.normal(kx, (N, cfg["cin"], H, W), jnp.float32)
        params = make_params(kp, cfg["cin"], cfg["cout"], cfg["expand_ratio"])

        y = inverted_residual_pallas(x, params, stride=cfg["stride"],
                                     expand_ratio=cfg["expand_ratio"])
        y = jax.block_until_ready(y)

        y_mxu = inverted_residual_ref(x, params, stride=cfg["stride"],
                                      expand_ratio=cfg["expand_ratio"],
                                      mxu_dtype=jnp.bfloat16)
        y_f32 = inverted_residual_ref(x, params, stride=cfg["stride"],
                                      expand_ratio=cfg["expand_ratio"])
        assert y.shape == y_f32.shape, (y.shape, y_f32.shape)
        err_mxu = float(jnp.max(jnp.abs(y - y_mxu)))   # vs MXU-precision reference
        err_f32 = float(jnp.max(jnp.abs(y - y_f32)))   # vs full-f32 module
        bf16_res = cfg["stride"] == 1 and cfg["cin"] == cfg["cout"] \
            and cfg["expand_ratio"] != 1
        tol_f32 = 5e-2 if bf16_res else 3e-2           # bf16 identity path when expand
        assert err_mxu < 2e-3, (cfg, err_mxu)
        assert err_f32 < tol_f32, (cfg, err_f32)
    print("KERNEL_OK")
</pallas_src>

<mosaic_0001>
module attributes {stable_mosaic.version = 11 : i64} {
  func.func @_inv_res_kernel(%arg0: i32, %arg1: i32, %arg2: memref<1x18x16x8xbf16, #tpu.memory_space<vmem>>, %arg3: memref<8x48xbf16, #tpu.memory_space<vmem>>, %arg4: memref<1x48xf32, #tpu.memory_space<vmem>>, %arg5: memref<3x3x48xf32, #tpu.memory_space<vmem>>, %arg6: memref<1x48xf32, #tpu.memory_space<vmem>>, %arg7: memref<8x48xbf16, #tpu.memory_space<vmem>>, %arg8: memref<8x1xf32, #tpu.memory_space<vmem>>, %arg9: memref<1x1x8x256xf32, #tpu.memory_space<vmem>>, %arg10: memref<18x32x48xf32, #tpu.memory_space<vmem>>) attributes {dimension_semantics = [#tpu.dimension_semantics<parallel>, #tpu.dimension_semantics<parallel>], iteration_bounds = array<i64: 2, 1>, scalar_prefetch = 0 : i64, scratch_operands = 1 : i64, tpu.core_type = #tpu.core_type<tc>, window_params = [{transform_indices = @transform_0, window_bounds = array<i64: 1, 18, 16, 8>}, {pipeline_mode = #tpu.pipeline_mode<synchronous>, transform_indices = @transform_1, window_bounds = array<i64: 8, 48>}, {pipeline_mode = #tpu.pipeline_mode<synchronous>, transform_indices = @transform_2, window_bounds = array<i64: 1, 48>}, {pipeline_mode = #tpu.pipeline_mode<synchronous>, transform_indices = @transform_3, window_bounds = array<i64: 3, 3, 48>}, {pipeline_mode = #tpu.pipeline_mode<synchronous>, transform_indices = @transform_4, window_bounds = array<i64: 1, 48>}, {pipeline_mode = #tpu.pipeline_mode<synchronous>, transform_indices = @transform_5, window_bounds = array<i64: 8, 48>}, {pipeline_mode = #tpu.pipeline_mode<synchronous>, transform_indices = @transform_6, window_bounds = array<i64: 8, 1>}, {transform_indices = @transform_7, window_bounds = array<i64: 1, 1, 8, 256>}]} {
    %c16_i32 = arith.constant 16 : i32
    %0 = arith.muli %arg1, %c16_i32 : i32
    %1 = tpu.assume_multiple %0, 16 : i32
    %c0 = arith.constant 0 : index
    %2 = arith.index_cast %1 : i32 to index
    %c0_0 = arith.constant 0 : index
    %c0_1 = arith.constant 0 : index
    %3 = vector.load %arg2[%c0, %2, %c0_0, %c0_1] : memref<1x18x16x8xbf16, #tpu.memory_space<vmem>>, vector<1x18x16x8xbf16>
    %4 = vector.shape_cast %3 : vector<1x18x16x8xbf16> to vector<18x16x8xbf16>
    %5 = vector.shape_cast %4 : vector<18x16x8xbf16> to vector<288x8xbf16>
    %c0_2 = arith.constant 0 : index
    %c0_3 = arith.constant 0 : index
    %6 = vector.load %arg3[%c0_2, %c0_3] : memref<8x48xbf16, #tpu.memory_space<vmem>>, vector<8x48xbf16>
    %cst = arith.constant dense<0.000000e+00> : vector<288x48xf32>
    %7 = tpu.matmul %5, %6, %cst {dimension_numbers = #tpu.dot_dimension_numbers<[1], [0], [0], [1], [0, 0, 1, 1], [], []>} : vector<288x8xbf16>, vector<8x48xbf16>, vector<288x48xf32> -> vector<288x48xf32>
    %c0_4 = arith.constant 0 : index
    %c0_5 = arith.constant 0 : index
    %8 = vector.load %arg4[%c0_4, %c0_5] : memref<1x48xf32, #tpu.memory_space<vmem>>, vector<1x48xf32>
    %9 = vector.broadcast %8 : vector<1x48xf32> to vector<288x48xf32>
    %10 = arith.addf %7, %9 : vector<288x48xf32>
    %cst_6 = arith.constant 0.000000e+00 : f32
    %cst_7 = arith.constant 6.000000e+00 : f32
    %11 = vector.broadcast %cst_6 : f32 to vector<288x48xf32>
    %12 = arith.maximumf %11, %10 : vector<288x48xf32>
    %13 = vector.broadcast %cst_7 : f32 to vector<288x48xf32>
    %14 = arith.minimumf %13, %12 : vector<288x48xf32>
    %15 = vector.shape_cast %14 : vector<288x48xf32> to vector<18x16x48xf32>
    %c0_8 = arith.constant 0 : index
    %c8 = arith.constant 8 : index
    %c0_9 = arith.constant 0 : index
    %16 = vector.load %arg10[%c0_8, %c8, %c0_9] : memref<18x32x48xf32, #tpu.memory_space<vmem>>, vector<18x16x48xf32>
    tpu.vector_store %arg10[%c0_8, %c8, %c0_9], %15 {strides = array<i32>} : memref<18x32x48xf32, #tpu.memory_space<vmem>>, vector<18x16x48xf32>,
    %cst_10 = arith.constant 0.000000e+00 : f32
    %17 = vector.broadcast %cst_10 : f32 to vector<18x1x48xf32>
    %c0_11 = arith.constant 0 : index
    %c7 = arith.constant 7 : index
    %c0_12 = arith.constant 0 : index
    %18 = vector.load %arg10[%c0_11, %c7, %c0_12] : memref<18x32x48xf32, #tpu.memory_space<vmem>>, vector<18x1x48xf32>
    tpu.vector_store %arg10[%c0_11, %c7, %c0_12], %17 {strides = array<i32>} : memref<18x32x48xf32, #tpu.memory_space<vmem>>, vector<18x1x48xf32>,
    %c0_13 = arith.constant 0 : index
    %c24 = arith.constant 24 : index
    %c0_14 = arith.constant 0 : index
    %19 = vector.load %arg10[%c0_13, %c24, %c0_14] : memref<18x32x48xf32, #tpu.memory_space<vmem>>, vector<18x1x48xf32>
    tpu.vector_store %arg10[%c0_13, %c24, %c0_14], %17 {strides = array<i32>} : memref<18x32x48xf32, #tpu.memory_space<vmem>>, vector<18x1x48xf32>,
    %c0_i32 = arith.constant 0 : i32
    %20 = arith.cmpi eq, %arg1, %c0_i32 : i32
    %21 = arith.extui %20 : i1 to i32
    %c0_i32_15 = arith.constant 0 : i32
    %22 = arith.cmpi ne, %21, %c0_i32_15 : i32
    scf.if %22 {
      %cst_65 = arith.constant 0.000000e+00 : f32
      %116 = vector.broadcast %cst_65 : f32 to vector<1x32x48xf32>
      %c0_66 = arith.constant 0 : index
      %c0_67 = arith.constant 0 : index
      %c0_68 = arith.constant 0 : index
      %117 = vector.load %arg10[%c0_66, %c0_67, %c0_68] : memref<18x32x48xf32, #tpu.memory_space<vmem>>, vector<1x32x48xf32>
      tpu.vector_store %arg10[%c0_66, %c0_67, %c0_68], %116 {strides = array<i32>} : memref<18x32x48xf32, #tpu.memory_space<vmem>>, vector<1x32x48xf32>,
    } else {
    }
    %c0_i32_16 = arith.constant 0 : i32
    %23 = arith.cmpi eq, %arg1, %c0_i32_16 : i32
    %24 = arith.extui %23 : i1 to i32
    %c0_i32_17 = arith.constant 0 : i32
    %25 = arith.cmpi ne, %24, %c0_i32_17 : i32
    scf.if %25 {
      %cst_65 = arith.constant 0.000000e+00 : f32
      %116 = vector.broadcast %cst_65 : f32 to vector<1x32x48xf32>
      %c17 = arith.constant 17 : index
      %c0_66 = arith.constant 0 : index
      %c0_67 = arith.constant 0 : index
      %117 = vector.load %arg10[%c17, %c0_66, %c0_67] : memref<18x32x48xf32, #tpu.memory_space<vmem>>, vector<1x32x48xf32>
      tpu.vector_store %arg10[%c17, %c0_66, %c0_67], %116 {strides = array<i32>} : memref<18x32x48xf32, #tpu.memory_space<vmem>>, vector<1x32x48xf32>,
    } else {
    }
    %cst_18 = arith.constant 0.000000e+00 : f32
    %26 = vector.broadcast %cst_18 : f32 to vector<16x16x48xf32>
    %c0_19 = arith.constant 0 : index
    %c7_20 = arith.constant 7 : index
    %c0_21 = arith.constant 0 : index
    %27 = vector.load %arg10[%c0_19, %c7_20, %c0_21] : memref<18x32x48xf32, #tpu.memory_space<vmem>>, vector<18x16x48xf32>
    %28 = vector.extract_strided_slice %27 {offsets = [0, 0, 0], sizes = [16, 16, 48], strides = [1, 1, 1]} : vector<18x16x48xf32> to vector<16x16x48xf32>
    %c0_22 = arith.constant 0 : index
    %c0_23 = arith.constant 0 : index
    %c0_24 = arith.constant 0 : index
    %29 = vector.load %arg5[%c0_22, %c0_23, %c0_24] : memref<3x3x48xf32, #tpu.memory_space<vmem>>, vector<1x1x48xf32>
    %30 = vector.shape_cast %29 : vector<1x1x48xf32> to vector<48xf32>
    %31 = vector.shape_cast %30 : vector<48xf32> to vector<1x1x48xf32>
    %32 = vector.broadcast %31 : vector<1x1x48xf32> to vector<16x16x48xf32>
    %33 = arith.mulf %28, %32 : vector<16x16x48xf32>
    %34 = arith.addf %26, %33 : vector<16x16x48xf32>
    %35 = vector.extract_strided_slice %27 {offsets = [1, 0, 0], sizes = [16, 16, 48], strides = [1, 1, 1]} : vector<18x16x48xf32> to vector<16x16x48xf32>
    %c1 = arith.constant 1 : index
    %c0_25 = arith.constant 0 : index
    %c0_26 = arith.constant 0 : index
    %36 = vector.load %arg5[%c1, %c0_25, %c0_26] : memref<3x3x48xf32, #tpu.memory_space<vmem>>, vector<1x1x48xf32>
    %37 = vector.shape_cast %36 : vector<1x1x48xf32> to vector<48xf32>
    %38 = vector.shape_cast %37 : vector<48xf32> to vector<1x1x48xf32>
    %39 = vector.broadcast %38 : vector<1x1x48xf32> to vector<16x16x48xf32>
    %40 = arith.mulf %35, %39 : vector<16x16x48xf32>
    %41 = arith.addf %34, %40 : vector<16x16x48xf32>
    %42 = vector.extract_strided_slice %27 {offsets = [2, 0, 0], sizes = [16, 16, 48], strides = [1, 1, 1]} : vector<18x16x48xf32> to vector<16x16x48xf32>
    %c2 = arith.constant 2 : index
    %c0_27 = arith.constant 0 : index
    %c0_28 = arith.constant 0 : index
    %43 = vector.load %arg5[%c2, %c0_27, %c0_28] : memref<3x3x48xf32, #tpu.memory_space<vmem>>, vector<1x1x48xf32>
    %44 = vector.shape_cast %43 : vector<1x1x48xf32> to vector<48xf32>
    %45 = vector.shape_cast %44 : vector<48xf32> to vector<1x1x48xf32>
    %46 = vector.broadcast %45 : vector<1x1x48xf32> to vector<16x16x48xf32>
    %47 = arith.mulf %42, %46 : vector<16x16x48xf32>
    %48 = arith.addf %41, %47 : vector<16x16x48xf32>
    %c0_29 = arith.constant 0 : index
    %c8_30 = arith.constant 8 : index
    %c0_31 = arith.constant 0 : index
    %49 = vector.load %arg10[%c0_29, %c8_30, %c0_31] : memref<18x32x48xf32, #tpu.memory_space<vmem>>, vector<18x16x48xf32>
    %50 = vector.extract_strided_slice %49 {offsets = [0, 0, 0], sizes = [16, 16, 48], strides = [1, 1, 1]} : vector<18x16x48xf32> to vector<16x16x48xf32>
    %c0_32 = arith.constant 0 : index
    %c1_33 = arith.constant 1 : index
    %c0_34 = arith.constant 0 : index
    %51 = vector.load %arg5[%c0_32, %c1_33, %c0_34] : memref<3x3x48xf32, #tpu.memory_space<vmem>>, vector<1x1x48xf32>
    %52 = vector.shape_cast %51 : vector<1x1x48xf32> to vector<48xf32>
    %53 = vector.shape_cast %52 : vector<48xf32> to vector<1x1x48xf32>
    %54 = vector.broadcast %53 : vector<1x1x48xf32> to vector<16x16x48xf32>
    %55 = arith.mulf %50, %54 : vector<16x16x48xf32>
    %56 = arith.addf %48, %55 : vector<16x16x48xf32>
    %57 = vector.extract_strided_slice %49 {offsets = [1, 0, 0], sizes = [16, 16, 48], strides = [1, 1, 1]} : vector<18x16x48xf32> to vector<16x16x48xf32>
    %c1_35 = arith.constant 1 : index
    %c1_36 = arith.constant 1 : index
    %c0_37 = arith.constant 0 : index
    %58 = vector.load %arg5[%c1_35, %c1_36, %c0_37] : memref<3x3x48xf32, #tpu.memory_space<vmem>>, vector<1x1x48xf32>
    %59 = vector.shape_cast %58 : vector<1x1x48xf32> to vector<48xf32>
    %60 = vector.shape_cast %59 : vector<48xf32> to vector<1x1x48xf32>
    %61 = vector.broadcast %60 : vector<1x1x48xf32> to vector<16x16x48xf32>
    %62 = arith.mulf %57, %61 : vector<16x16x48xf32>
    %63 = arith.addf %56, %62 : vector<16x16x48xf32>
    %64 = vector.extract_strided_slice %49 {offsets = [2, 0, 0], sizes = [16, 16, 48], strides = [1, 1, 1]} : vector<18x16x48xf32> to vector<16x16x48xf32>
    %c2_38 = arith.constant 2 : index
    %c1_39 = arith.constant 1 : index
    %c0_40 = arith.constant 0 : index
    %65 = vector.load %arg5[%c2_38, %c1_39, %c0_40] : memref<3x3x48xf32, #tpu.memory_space<vmem>>, vector<1x1x48xf32>
    %66 = vector.shape_cast %65 : vector<1x1x48xf32> to vector<48xf32>
    %67 = vector.shape_cast %66 : vector<48xf32> to vector<1x1x48xf32>
    %68 = vector.broadcast %67 : vector<1x1x48xf32> to vector<16x16x48xf32>
    %69 = arith.mulf %64, %68 : vector<16x16x48xf32>
    %70 = arith.addf %63, %69 : vector<16x16x48xf32>
    %c0_41 = arith.constant 0 : index
    %c9 = arith.constant 9 : index
    %c0_42 = arith.constant 0 : index
    %71 = vector.load %arg10[%c0_41, %c9, %c0_42] : memref<18x32x48xf32, #tpu.memory_space<vmem>>, vector<18x16x48xf32>
    %72 = vector.extract_strided_slice %71 {offsets = [0, 0, 0], sizes = [16, 16, 48], strides = [1, 1, 1]} : vector<18x16x48xf32> to vector<16x16x48xf32>
    %c0_43 = arith.constant 0 : index
    %c2_44 = arith.constant 2 : index
    %c0_45 = arith.constant 0 : index
    %73 = vector.load %arg5[%c0_43, %c2_44, %c0_45] : memref<3x3x48xf32, #tpu.memory_space<vmem>>, vector<1x1x48xf32>
    %74 = vector.shape_cast %73 : vector<1x1x48xf32> to vector<48xf32>
    %75 = vector.shape_cast %74 : vector<48xf32> to vector<1x1x48xf32>
    %76 = vector.broadcast %75 : vector<1x1x48xf32> to vector<16x16x48xf32>
    %77 = arith.mulf %72, %76 : vector<16x16x48xf32>
    %78 = arith.addf %70, %77 : vector<16x16x48xf32>
    %79 = vector.extract_strided_slice %71 {offsets = [1, 0, 0], sizes = [16, 16, 48], strides = [1, 1, 1]} : vector<18x16x48xf32> to vector<16x16x48xf32>
    %c1_46 = arith.constant 1 : index
    %c2_47 = arith.constant 2 : index
    %c0_48 = arith.constant 0 : index
    %80 = vector.load %arg5[%c1_46, %c2_47, %c0_48] : memref<3x3x48xf32, #tpu.memory_space<vmem>>, vector<1x1x48xf32>
    %81 = vector.shape_cast %80 : vector<1x1x48xf32> to vector<48xf32>
    %82 = vector.shape_cast %81 : vector<48xf32> to vector<1x1x48xf32>
    %83 = vector.broadcast %82 : vector<1x1x48xf32> to vector<16x16x48xf32>
    %84 = arith.mulf %79, %83 : vector<16x16x48xf32>
    %85 = arith.addf %78, %84 : vector<16x16x48xf32>
    %86 = vector.extract_strided_slice %71 {offsets = [2, 0, 0], sizes = [16, 16, 48], strides = [1, 1, 1]} : vector<18x16x48xf32> to vector<16x16x48xf32>
    %c2_49 = arith.constant 2 : index
    %c2_50 = arith.constant 2 : index
    %c0_51 = arith.constant 0 : index
    %87 = vector.load %arg5[%c2_49, %c2_50, %c0_51] : memref<3x3x48xf32, #tpu.memory_space<vmem>>, vector<1x1x48xf32>
    %88 = vector.shape_cast %87 : vector<1x1x48xf32> to vector<48xf32>
    %89 = vector.shape_cast %88 : vector<48xf32> to vector<1x1x48xf32>
    %90 = vector.broadcast %89 : vector<1x1x48xf32> to vector<16x16x48xf32>
    %91 = arith.mulf %86, %90 : vector<16x16x48xf32>
    %92 = arith.addf %85, %91 : vector<16x16x48xf32>
    %c0_52 = arith.constant 0 : index
    %c0_53 = arith.constant 0 : index
    %93 = vector.load %arg6[%c0_52, %c0_53] : memref<1x48xf32, #tpu.memory_space<vmem>>, vector<1x48xf32>
    %94 = vector.shape_cast %93 : vector<1x48xf32> to vector<1x1x48xf32>
    %95 = vector.broadcast %94 : vector<1x1x48xf32> to vector<16x16x48xf32>
    %96 = arith.addf %92, %95 : vector<16x16x48xf32>
    %cst_54 = arith.constant 0.000000e+00 : f32
    %cst_55 = arith.constant 6.000000e+00 : f32
    %97 = vector.broadcast %cst_54 : f32 to vector<16x16x48xf32>
    %98 = arith.maximumf %97, %96 : vector<16x16x48xf32>
    %99 = vector.broadcast %cst_55 : f32 to vector<16x16x48xf32>
    %100 = arith.minimumf %99, %98 : vector<16x16x48xf32>
    %101 = vector.shape_cast %100 : vector<16x16x48xf32> to vector<256x48xf32>
    %102 = arith.truncf %101 : vector<256x48xf32> to vector<256x48xbf16>
    %c0_56 = arith.constant 0 : index
    %c0_57 = arith.constant 0 : index
    %103 = vector.load %arg7[%c0_56, %c0_57] : memref<8x48xbf16, #tpu.memory_space<vmem>>, vector<8x48xbf16>
    %cst_58 = arith.constant dense<0.000000e+00> : vector<8x256xf32>
    %104 = tpu.matmul %103, %102, %cst_58 {dimension_numbers = #tpu.dot_dimension_numbers<[1], [1], [0], [0], [0, 0, 1, 0], [], []>} : vector<8x48xbf16>, vector<256x48xbf16>, vector<8x256xf32> -> vector<8x256xf32>
    %c0_59 = arith.constant 0 : index
    %c0_60 = arith.constant 0 : index
    %105 = vector.load %arg8[%c0_59, %c0_60] : memref<8x1xf32, #tpu.memory_space<vmem>>, vector<8x1xf32>
    %106 = vector.broadcast %105 : vector<8x1xf32> to vector<8x256xf32>
    %107 = arith.addf %104, %106 : vector<8x256xf32>
    %108 = vector.extract_strided_slice %4 {offsets = [1, 0, 0], sizes = [16, 16, 8], strides = [1, 1, 1]} : vector<18x16x8xbf16> to vector<16x16x8xbf16>
    %109 = vector.shape_cast %108 : vector<16x16x8xbf16> to vector<256x8xbf16>
    %110 = arith.extf %109 : vector<256x8xbf16> to vector<256x8xf32>
    %111 = tpu.transpose %110, [1, 0] : vector<256x8xf32> -> vector<8x256xf32>
    %112 = arith.addf %107, %111 : vector<8x256xf32>
    %c0_61 = arith.constant 0 : index
    %c0_62 = arith.constant 0 : index
    %c0_63 = arith.constant 0 : index
    %c0_64 = arith.constant 0 : index
    %113 = vector.load %arg9[%c0_61, %c0_62, %c0_63, %c0_64] : memref<1x1x8x256xf32, #tpu.memory_space<vmem>>, vector<1x1x8x256xf32>
    %114 = vector.shape_cast %113 : vector<1x1x8x256xf32> to vector<8x256xf32>
    %115 = vector.shape_cast %112 : vector<8x256xf32> to vector<1x1x8x256xf32>
    tpu.vector_store %arg9[%c0_61, %c0_62, %c0_63, %c0_64], %115 {strides = array<i32>} : memref<1x1x8x256xf32, #tpu.memory_space<vmem>>, vector<1x1x8x256xf32>,
    return
  }
  func.func @transform_0(%arg0: i32, %arg1: i32) -> (i32, i32, i32, i32) {
    %c0_i32 = arith.constant 0 : i32
    %c0_i32_0 = arith.constant 0 : i32
    %c0_i32_1 = arith.constant 0 : i32
    %c0_i32_2 = arith.constant 0 : i32
    return %arg0, %c0_i32, %c0_i32_0, %c0_i32_1 : i32, i32, i32, i32
  }
  func.func @transform_1(%arg0: i32, %arg1: i32) -> (i32, i32) {
    %c0_i32 = arith.constant 0 : i32
    %c0_i32_0 = arith.constant 0 : i32
    %c0_i32_1 = arith.constant 0 : i32
    return %c0_i32, %c0_i32_0 : i32, i32
  }
  func.func @transform_2(%arg0: i32, %arg1: i32) -> (i32, i32) {
    %c0_i32 = arith.constant 0 : i32
    %c0_i32_0 = arith.constant 0 : i32
    %c0_i32_1 = arith.constant 0 : i32
    return %c0_i32, %c0_i32_0 : i32, i32
  }
  func.func @transform_3(%arg0: i32, %arg1: i32) -> (i32, i32, i32) {
    %c0_i32 = arith.constant 0 : i32
    %c0_i32_0 = arith.constant 0 : i32
    %c0_i32_1 = arith.constant 0 : i32
    %c0_i32_2 = arith.constant 0 : i32
    return %c0_i32, %c0_i32_0, %c0_i32_1 : i32, i32, i32
  }
  func.func @transform_4(%arg0: i32, %arg1: i32) -> (i32, i32) {
    %c0_i32 = arith.constant 0 : i32
    %c0_i32_0 = arith.constant 0 : i32
    %c0_i32_1 = arith.constant 0 : i32
    return %c0_i32, %c0_i32_0 : i32, i32
  }
  func.func @transform_5(%arg0: i32, %arg1: i32) -> (i32, i32) {
    %c0_i32 = arith.constant 0 : i32
    %c0_i32_0 = arith.constant 0 : i32
    %c0_i32_1 = arith.constant 0 : i32
    return %c0_i32, %c0_i32_0 : i32, i32
  }
  func.func @transform_6(%arg0: i32, %arg1: i32) -> (i32, i32) {
    %c0_i32 = arith.constant 0 : i32
    %c0_i32_0 = arith.constant 0 : i32
    %c0_i32_1 = arith.constant 0 : i32
    return %c0_i32, %c0_i32_0 : i32, i32
  }
  func.func @transform_7(%arg0: i32, %arg1: i32) -> (i32, i32, i32, i32) {
    %c0_i32 = arith.constant 0 : i32
    %c0_i32_0 = arith.constant 0 : i32
    %c0_i32_1 = arith.constant 0 : i32
    return %arg0, %arg1, %c0_i32, %c0_i32_0 : i32, i32, i32, i32
  }
}

</mosaic_0001>

<llo_original>
// kernel: tpu_custom_call.1
$region0: #{tpu_custom_call.1}
  #allocation0 [shape = 'u32[]', space=smem, size = 0x4, offset = 0x4, fixed_abs, tag = 'smem constant byte address 0x4 - core index']
  #allocation1 [shape = 'u32[144,128]{1,0:T(1,128)}', space=vmem, size = 0x12000, scoped, tag = 'internal scratch']
  #allocation2 [shape = 'f32[18,32,48]{2,1,0:T(8,128)}', space=vmem, size = 0x48000, scoped, tag = 'scratch operand']
  %s0 = inlined_call_operand.vmem [shape: bf16[2,18,16,8], index: 0, kind: input, shape index: {}]
  %s1 = inlined_call_operand.vmem [shape: bf16[8,48], index: 1, kind: input, shape index: {}]
  %s2 = inlined_call_operand.vmem [shape: f32[1,48], index: 2, kind: input, shape index: {}]
  %s3 = inlined_call_operand.vmem [shape: f32[3,3,48], index: 3, kind: input, shape index: {}]
  %s4 = inlined_call_operand.vmem [shape: f32[1,48], index: 4, kind: input, shape index: {}]
  %s5 = inlined_call_operand.vmem [shape: bf16[8,48], index: 5, kind: input, shape index: {}]
  %s6 = inlined_call_operand.vmem [shape: f32[8,1], index: 6, kind: input, shape index: {}]
  %s7 = inlined_call_operand.hbm [shape: f32[2,1,8,256], index: 7, kind: output, shape index: {}]
  %s8 = sld [smem:[#allocation0]]
  $region65: #{tpu_custom_call.1} parent=0
    _
  %s10 = ssub.s32 1, %s8
  %s11 = scalar_select 0, %s10, %s8
  $region1: #{tpu_custom_call.1} parent=0
    #allocation3 [shape = 'u8[16384]{0}', space=vmem, size = 0x4000, scoped, tag = 'output window, operand 0']
    #allocation4 [shape = 's32[2]{0}', space=sflag, size = 0x8, scoped, tag = 'scoped memory for tpu_custom_call.1']
    %12 = vsyncpa [#allocation4], 0
    %s13 = scalar_lea.sflag [#allocation4], 1
    %14 = vsyncpa %s13, 0
    loop: start=0, step=1, limit=4
    $region2: #{tpu_custom_call.1} parent=1 // loop_pre_header
      _
    $region3: #{tpu_custom_call.1} parent=1 // loop_header
      %s16 = sphi 0, %s20
      %p17 = scmp.ge.s32.totalorder %s16, 4
      %s23 = sphi 0, %s35
      %s24 = sphi 0, %s31
      %s25 = sphi 0, %s23
      %s26 = sphi 0, %s24
      %s27 = sphi 0, %s25
      %s28 = sphi 0, %s26
      %s38 = sphi 0, %s40
      %s41 = sphi 0, %s38
      %s42 = sphi 0, %s41
      %s58 = sphi 0, %s42
      %s62 = sphi 0, %s62
      %s64 = sphi 0, %s62
      %s65 = sphi 0, %s64
      %s79 = sphi 0, %s65
      %s83 = sphi 0, %s83
      %s85 = sphi 0, %s83
      %s86 = sphi 0, %s85
      %s100 = sphi 0, %s86
      %s104 = sphi 0, %s104
      %s106 = sphi 0, %s104
      %s107 = sphi 0, %s106
      %s121 = sphi 0, %s107
      %s125 = sphi 0, %s125
      %s127 = sphi 0, %s125
      %s128 = sphi 0, %s127
      %s142 = sphi 0, %s128
      %s146 = sphi 0, %s146
      %s148 = sphi 0, %s146
      %s149 = sphi 0, %s148
      %s163 = sphi 0, %s149
      %s167 = sphi 0, %s167
      %s169 = sphi 0, %s167
      %s170 = sphi 0, %s169
      %s184 = sphi 0, %s170
      %s192 = sphi 0, %s194
      %s195 = sphi 0, %s192
      %s196 = sphi 0, %s195
      %s212 = sphi 0, %s196
    $region4: #{tpu_custom_call.1} parent=1 // loop_header_branch
      %19 = sbr.rel (%p17) target = $region8
    $region5: #{tpu_custom_call.1} parent=1 // loop_body
      %s21 = ssub.s32 %s16, 1
      %s22 = ssub.s32 %s16, 2
      %s29 = sadd.s32 1, %s24
      %p30 = scmp.ge.s32.totalorder %s29, 1
      %s31 = scalar_select %p30, 0, %s29
      %s32 = sadd.s32 1, %s23
      %s33 = scalar_select %p30, %s32, %s23
      %p34 = scmp.ge.s32.totalorder %s33, 2
      %s35 = scalar_select %p34, 0, %s33
      %s36 = ssub.s32 %s23, %s35
      %p37 = scmp.eq.s32.totalorder %s36, 0
      %s39 = sadd.s32 %s38, 1
      %s40 = scalar_select %p37, %s38, %s39
      %p43 = pneg %p37
      %p44 = scmp.eq.s32.totalorder %s16, 1
      %p45 = por %p43, %p44
      %p46 = scmp.ne.s32.totalorder %s38, %s41
      %p47 = scmp.eq.s32.totalorder %s16, 0
      %p48 = por %p46, %p47
      %p49 = scmp.ne.s32.totalorder %s38, %s41
      %p50 = scmp.eq.s32.totalorder %s21, 1
      %p51 = por %p49, %p50
      %p52 = scmp.ne.s32.totalorder %s41, %s42
      %p53 = scmp.eq.s32.totalorder %s21, 0
      %p54 = por %p52, %p53
      %p55 = scmp.ne.s32.totalorder %s41, %s42
      %p56 = scmp.eq.s32.totalorder %s22, 1
      %p57 = por %p55, %p56
      %p59 = scmp.ne.s32.totalorder %s42, %s58
      %p60 = scmp.eq.s32.totalorder %s22, 0
      %p61 = por %p59, %p60
      %s63 = sadd.s32 %s62, 1
      %p66 = scmp.eq.s32.totalorder %s16, 1
      %p67 = scmp.ne.s32.totalorder %s62, %s64
      %p68 = scmp.eq.s32.totalorder %s16, 0
      %p69 = por %p67, %p68
      %p70 = scmp.ne.s32.totalorder %s62, %s64
      %p71 = scmp.eq.s32.totalorder %s21, 1
      %p72 = por %p70, %p71
      %p73 = scmp.ne.s32.totalorder %s64, %s65
      %p74 = scmp.eq.s32.totalorder %s21, 0
      %p75 = por %p73, %p74
      %p76 = scmp.ne.s32.totalorder %s64, %s65
      %p77 = scmp.eq.s32.totalorder %s22, 1
      %p78 = por %p76, %p77
      %p80 = scmp.ne.s32.totalorder %s65, %s79
      %p81 = scmp.eq.s32.totalorder %s22, 0
      %p82 = por %p80, %p81
      %s84 = sadd.s32 %s83, 1
      %p87 = scmp.eq.s32.totalorder %s16, 1
      %p88 = scmp.ne.s32.totalorder %s83, %s85
      %p89 = scmp.eq.s32.totalorder %s16, 0
      %p90 = por %p88, %p89
      %p91 = scmp.ne.s32.totalorder %s83, %s85
      %p92 = scmp.eq.s32.totalorder %s21, 1
      %p93 = por %p91, %p92
      %p94 = scmp.ne.s32.totalorder %s85, %s86
      %p95 = scmp.eq.s32.totalorder %s21, 0
      %p96 = por %p94, %p95
      %p97 = scmp.ne.s32.totalorder %s85, %s86
      %p98 = scmp.eq.s32.totalorder %s22, 1
      %p99 = por %p97, %p98
      %p101 = scmp.ne.s32.totalorder %s86, %s100
      %p102 = scmp.eq.s32.totalorder %s22, 0
      %p103 = por %p101, %p102
      %s105 = sadd.s32 %s104, 1
      %p108 = scmp.eq.s32.totalorder %s16, 1
      %p109 = scmp.ne.s32.totalorder %s104, %s106
      %p110 = scmp.eq.s32.totalorder %s16, 0
      %p111 = por %p109, %p110
      %p112 = scmp.ne.s32.totalorder %s104, %s106
      %p113 = scmp.eq.s32.totalorder %s21, 1
      %p114 = por %p112, %p113
      %p115 = scmp.ne.s32.totalorder %s106, %s107
      %p116 = scmp.eq.s32.totalorder %s21, 0
      %p117 = por %p115, %p116
      %p118 = scmp.ne.s32.totalorder %s106, %s107
      %p119 = scmp.eq.s32.totalorder %s22, 1
      %p120 = por %p118, %p119
      %p122 = scmp.ne.s32.totalorder %s107, %s121
      %p123 = scmp.eq.s32.totalorder %s22, 0
      %p124 = por %p122, %p123
      %s126 = sadd.s32 %s125, 1
      %p129 = scmp.eq.s32.totalorder %s16, 1
      %p130 = scmp.ne.s32.totalorder %s125, %s127
      %p131 = scmp.eq.s32.totalorder %s16, 0
      %p132 = por %p130, %p131
      %p133 = scmp.ne.s32.totalorder %s125, %s127
      %p134 = scmp.eq.s32.totalorder %s21, 1
      %p135 = por %p133, %p134
      %p136 = scmp.ne.s32.totalorder %s127, %s128
      %p137 = scmp.eq.s32.totalorder %s21, 0
      %p138 = por %p136, %p137
      %p139 = scmp.ne.s32.totalorder %s127, %s128
      %p140 = scmp.eq.s32.totalorder %s22, 1
      %p141 = por %p139, %p140
      %p143 = scmp.ne.s32.totalorder %s128, %s142
      %p144 = scmp.eq.s32.totalorder %s22, 0
      %p145 = por %p143, %p144
      %s147 = sadd.s32 %s146, 1
      %p150 = scmp.eq.s32.totalorder %s16, 1
      %p151 = scmp.ne.s32.totalorder %s146, %s148
      %p152 = scmp.eq.s32.totalorder %s16, 0
      %p153 = por %p151, %p152
      %p154 = scmp.ne.s32.totalorder %s146, %s148
      %p155 = scmp.eq.s32.totalorder %s21, 1
      %p156 = por %p154, %p155
      %p157 = scmp.ne.s32.totalorder %s148, %s149
      %p158 = scmp.eq.s32.totalorder %s21, 0
      %p159 = por %p157, %p158
      %p160 = scmp.ne.s32.totalorder %s148, %s149
      %p161 = scmp.eq.s32.totalorder %s22, 1
      %p162 = por %p160, %p161
      %p164 = scmp.ne.s32.totalorder %s149, %s163
      %p165 = scmp.eq.s32.totalorder %s22, 0
      %p166 = por %p164, %p165
      %s168 = sadd.s32 %s167, 1
      %p171 = scmp.eq.s32.totalorder %s16, 1
      %p172 = scmp.ne.s32.totalorder %s167, %s169
      %p173 = scmp.eq.s32.totalorder %s16, 0
      %p174 = por %p172, %p173
      %p175 = scmp.ne.s32.totalorder %s167, %s169
      %p176 = scmp.eq.s32.totalorder %s21, 1
      %p177 = por %p175, %p176
      %p178 = scmp.ne.s32.totalorder %s169, %s170
      %p179 = scmp.eq.s32.totalorder %s21, 0
      %p180 = por %p178, %p179
      %p181 = scmp.ne.s32.totalorder %s169, %s170
      %p182 = scmp.eq.s32.totalorder %s22, 1
      %p183 = por %p181, %p182
      %p185 = scmp.ne.s32.totalorder %s170, %s184
      %p186 = scmp.eq.s32.totalorder %s22, 0
      %p187 = por %p185, %p186
      %s188 = ssub.s32 %s23, %s35
      %s189 = ssub.s32 %s24, %s31
      %s190 = sor.u32 %s188, %s189
      %p191 = scmp.eq.s32.totalorder %s190, 0
      %s193 = sadd.s32 %s192, 1
      %s194 = scalar_select %p191, %s192, %s193
      %p197 = pneg %p191
      %p198 = scmp.eq.s32.totalorder %s16, 1
      %p199 = por %p197, %p198
      %p200 = scmp.ne.s32.totalorder %s192, %s195
      %p201 = scmp.eq.s32.totalorder %s16, 0
      %p202 = por %p200, %p201
      %p203 = scmp.ne.s32.totalorder %s192, %s195
      %p204 = scmp.eq.s32.totalorder %s21, 1
      %p205 = por %p203, %p204
      %p206 = scmp.ne.s32.totalorder %s195, %s196
      %p207 = scmp.eq.s32.totalorder %s21, 0
      %p208 = por %p206, %p207
      %p209 = scmp.ne.s32.totalorder %s195, %s196
      %p210 = scmp.eq.s32.totalorder %s22, 1
      %p211 = por %p209, %p210
      %p213 = scmp.ne.s32.totalorder %s196, %s212
      %p214 = scmp.eq.s32.totalorder %s22, 0
      %p215 = por %p213, %p214
      %p216 = scmp.le.s32.totalorder 1, %s16
      %p217 = scmp.lt.s32.totalorder %s16, 3
      %p218 = pnand %p216, %p217
      %p219 = pneg %p218
      // Predicated region
      $region9: #{tpu_custom_call.1} parent=5 // pred_check
        _
      $region10: #{tpu_custom_call.1} parent=5 // pred_check_branch
        %221 = sbr.rel (%p218) target = $region12
      $region11: #{tpu_custom_call.1} parent=5 // pred_region
        %s222 = ssub.s32 %s16, 1
        // Predicated region
        $region13: #{tpu_custom_call.1} parent=11 // pred_check
          %p223 = pneg %p75
        $region14: #{tpu_custom_call.1} parent=11 // pred_check_branch
          %225 = sbr.rel (%p223) target = $region16
        $region15: #{tpu_custom_call.1} parent=11 // pred_region
          _
        $region16: #{tpu_custom_call.1} parent=11 // pred_fallthru
          _
        // Predicated region
        $region17: #{tpu_custom_call.1} parent=11 // pred_check
          %p226 = pneg %p96
        $region18: #{tpu_custom_call.1} parent=11 // pred_check_branch
          %228 = sbr.rel (%p226) target = $region20
        $region19: #{tpu_custom_call.1} parent=11 // pred_region
          _
        $region20: #{tpu_custom_call.1} parent=11 // pred_fallthru
          _
        // Predicated region
        $region21: #{tpu_custom_call.1} parent=11 // pred_check
          %p229 = pneg %p117
        $region22: #{tpu_custom_call.1} parent=11 // pred_check_branch
          %231 = sbr.rel (%p229) target = $region24
        $region23: #{tpu_custom_call.1} parent=11 // pred_region
          _
        $region24: #{tpu_custom_call.1} parent=11 // pred_fallthru
          _
        // Predicated region
        $region25: #{tpu_custom_call.1} parent=11 // pred_check
          %p232 = pneg %p138
        $region26: #{tpu_custom_call.1} parent=11 // pred_check_branch
          %234 = sbr.rel (%p232) target = $region28
        $region27: #{tpu_custom_call.1} parent=11 // pred_region
          _
        $region28: #{tpu_custom_call.1} parent=11 // pred_fallthru
          _
        // Predicated region
        $region29: #{tpu_custom_call.1} parent=11 // pred_check
          %p235 = pneg %p159
        $region30: #{tpu_custom_call.1} parent=11 // pred_check_branch
          %237 = sbr.rel (%p235) target = $region32
        $region31: #{tpu_custom_call.1} parent=11 // pred_region
          _
        $region32: #{tpu_custom_call.1} parent=11 // pred_fallthru
          _
        // Predicated region
        $region33: #{tpu_custom_call.1} parent=11 // pred_check
          %p238 = pneg %p180
        $region34: #{tpu_custom_call.1} parent=11 // pred_check_branch
          %240 = sbr.rel (%p238) target = $region36
        $region35: #{tpu_custom_call.1} parent=11 // pred_region
          _
        $region36: #{tpu_custom_call.1} parent=11 // pred_fallthru
          _
      $region12: #{tpu_custom_call.1} parent=5 // pred_fallthru
        _
      %p241 = scmp.lt.s32.totalorder %s16, 2
      // Predicated region
      $region37: #{tpu_custom_call.1} parent=5 // pred_check
        %p242 = pneg %p241
      $region38: #{tpu_custom_call.1} parent=5 // pred_check_branch
        %244 = sbr.rel (%p242) target = $region40
      $region39: #{tpu_custom_call.1} parent=5 // pred_region
        // Predicated region
        $region41: #{tpu_custom_call.1} parent=39 // pred_check
          %p245 = pneg %p48
        $region42: #{tpu_custom_call.1} parent=39 // pred_check_branch
          %247 = sbr.rel (%p245) target = $region44
        $region43: #{tpu_custom_call.1} parent=39 // pred_region
          %p248 = scmp.lt.s32.totalorder %s23, 1
          %s249 = scalar_select %p248, %s23, 1
          %s250 = smul.addr %s249, 36
          %s251 = smul.addr %s250, 4
          %s252 = scalar_lea.vmem %s0, %s251
        $region44: #{tpu_custom_call.1} parent=39 // pred_fallthru
          _
      $region40: #{tpu_custom_call.1} parent=5 // pred_fallthru
        _
      %p253 = scmp.le.s32.totalorder 1, %s16
      %p254 = scmp.lt.s32.totalorder %s16, 3
      %p255 = pnand %p253, %p254
      %p256 = pneg %p255
      // Predicated region
      $region45: #{tpu_custom_call.1} parent=5 // pred_check
        _
      $region46: #{tpu_custom_call.1} parent=5 // pred_check_branch
        %258 = sbr.rel (%p255) target = $region48
      $region47: #{tpu_custom_call.1} parent=5 // pred_region
        %s259 = ssub.s32 %s16, 1
        %p260 = scmp.lt.s32.totalorder %s25, 1
        %s261 = scalar_select %p260, %s25, 1
        %s262 = smul.addr %s261, 36
        %s263 = smul.addr %s262, 4
        %s264 = scalar_lea.vmem %s0, %s263
        %p265 = pneg %p54
        %p266 = pneg %p51
        %p267 = pneg %p75
        %p268 = pneg %p72
        %p269 = pneg %p96
        %p270 = pneg %p93
        %p271 = pneg %p117
        %p272 = pneg %p114
        %p273 = pneg %p138
        %p274 = pneg %p135
        %p275 = pneg %p159
        %p276 = pneg %p156
        %p277 = pneg %p180
        %p278 = pneg %p177
        %p279 = pneg %p208
        %p280 = pneg %p205
        %s281 = sand.u32 %s195, 1
        %s282 = scalar_lea.sflag [#allocation4], %s281
        %s283 = sand.u32 %s195, 1
        %s284 = smul.addr %s283, 16
        %s285 = scalar_lea.vmem [#allocation3], %s284
        %p286 = scmp.lt.s32.totalorder %s25, 1
        %s287 = scalar_select %p286, %s25, 1
        %s288 = smul.addr %s287, 36
        %s289 = smul.addr %s288, 4
        %s290 = scalar_lea.vmem %s0, %s289
        %s292 = smul.u32 %s26, 16
        %s293 = smul.u32 %s292, 2
        %s294 = smul.addr %s293, 4
        %s295 = scalar_lea.vmem %s290, %s294
        %v296 = vld [vmem:[%s295] sm:$0xf]
        %v297 = vld [vmem:[%s295 + $0x4] sm:$0xf]
        %v298 = vld [vmem:[%s295 + $0x8] sm:$0xf]
        %v299 = vld [vmem:[%s295 + $0xc] sm:$0xf]
        %v300 = vld [vmem:[%s295 + $0x10] sm:$0xf]
        %v301 = vld [vmem:[%s295 + $0x14] sm:$0xf]
        %v302 = vld [vmem:[%s295 + $0x18] sm:$0xf]
        %v303 = vld [vmem:[%s295 + $0x1c] sm:$0xf]
        %v304 = vld [vmem:[%s295 + $0x20] sm:$0xf]
        %v305 = vld [vmem:[%s295 + $0x24] sm:$0xf]
        %v306 = vld [vmem:[%s295 + $0x28] sm:$0xf]
        %v307 = vld [vmem:[%s295 + $0x2c] sm:$0xf]
        %v308 = vld [vmem:[%s295 + $0x30] sm:$0xf]
        %v309 = vld [vmem:[%s295 + $0x34] sm:$0xf]
        %v310 = vld [vmem:[%s295 + $0x38] sm:$0xf]
        %v311 = vld [vmem:[%s295 + $0x3c] sm:$0xf]
        %v312 = vld [vmem:[%s295 + $0x40] sm:$0xf]
        %v313 = vld [vmem:[%s295 + $0x44] sm:$0xf]
        %v314 = vld [vmem:[%s295 + $0x48] sm:$0xf]
        %v315 = vld [vmem:[%s295 + $0x4c] sm:$0xf]
        %v316 = vld [vmem:[%s295 + $0x50] sm:$0xf]
        %v317 = vld [vmem:[%s295 + $0x54] sm:$0xf]
        %v318 = vld [vmem:[%s295 + $0x58] sm:$0xf]
        %v319 = vld [vmem:[%s295 + $0x5c] sm:$0xf]
        %v320 = vld [vmem:[%s295 + $0x60] sm:$0xf]
        %v321 = vld [vmem:[%s295 + $0x64] sm:$0xf]
        %v322 = vld [vmem:[%s295 + $0x68] sm:$0xf]
        %v323 = vld [vmem:[%s295 + $0x6c] sm:$0xf]
        %v324 = vld [vmem:[%s295 + $0x70] sm:$0xf]
        %v325 = vld [vmem:[%s295 + $0x74] sm:$0xf]
        %v326 = vld [vmem:[%s295 + $0x78] sm:$0xf]
        %v327 = vld [vmem:[%s295 + $0x7c] sm:$0xf]
        %v328 = vld [vmem:[%s295 + $0x80] sm:$0xf]
        %v329 = vld [vmem:[%s295 + $0x84] sm:$0xf]
        %v330 = vld [vmem:[%s295 + $0x88] sm:$0xf]
        %v331 = vld [vmem:[%s295 + $0x8c] sm:$0xf]
        %v332 = vld [vmem:[%s1] sm:$0xf]
        %v333 = vld [vmem:[%s2] sm:$0x1]
        %v335 = vlaneseq
        %v336 = vshrl.u32 %v335, 7
        %v337 = vsub.s32 0, %v336
        %v338 = vrot.slane %v333, %v337
        %v376 = vunpack.c.l.b16 %v296
        %v377 = vunpack.c.l.b16 %v297
        %v378 = vunpack.c.l.b16 %v298
        %v379 = vunpack.c.l.b16 %v299
        %v380 = vunpack.c.l.b16 %v300
        %v381 = vunpack.c.l.b16 %v301
        %v382 = vunpack.c.l.b16 %v302
        %v383 = vunpack.c.l.b16 %v303
        %v384 = vunpack.c.l.b16 %v304
        %v385 = vunpack.c.l.b16 %v305
        %v386 = vunpack.c.l.b16 %v306
        %v387 = vunpack.c.l.b16 %v307
        %v388 = vunpack.c.l.b16 %v308
        %v389 = vunpack.c.l.b16 %v309
        %v390 = vunpack.c.l.b16 %v310
        %v391 = vunpack.c.l.b16 %v311
        %v392 = vunpack.c.l.b16 %v312
        %v393 = vunpack.c.l.b16 %v313
        %v394 = vunpack.c.l.b16 %v314
        %v395 = vunpack.c.l.b16 %v315
        %v396 = vunpack.c.l.b16 %v316
        %v397 = vunpack.c.l.b16 %v317
        %v398 = vunpack.c.l.b16 %v318
        %v399 = vunpack.c.l.b16 %v319
        %v400 = vunpack.c.l.b16 %v320
        %v401 = vunpack.c.l.b16 %v321
        %v402 = vunpack.c.l.b16 %v322
        %v403 = vunpack.c.l.b16 %v323
        %v404 = vunpack.c.l.b16 %v324
        %v405 = vunpack.c.l.b16 %v325
        %v406 = vunpack.c.l.b16 %v326
        %v407 = vunpack.c.l.b16 %v327
        %v408 = vunpack.c.l.b16 %v328
        %v409 = vunpack.c.l.b16 %v329
        %v410 = vunpack.c.l.b16 %v330
        %v411 = vunpack.c.l.b16 %v331
        %v412 = vpack.c.b16 %v377, %v376
        %v413 = vpack.c.b16 %v379, %v378
        %v414 = vpack.c.b16 %v381, %v380
        %v415 = vpack.c.b16 %v383, %v382
        %v416 = vpack.c.b16 %v385, %v384
        %v417 = vpack.c.b16 %v387, %v386
        %v418 = vpack.c.b16 %v389, %v388
        %v419 = vpack.c.b16 %v391, %v390
        %v420 = vpack.c.b16 %v393, %v392
        %v421 = vpack.c.b16 %v395, %v394
        %v422 = vpack.c.b16 %v397, %v396
        %v423 = vpack.c.b16 %v399, %v398
        %v424 = vpack.c.b16 %v401, %v400
        %v425 = vpack.c.b16 %v403, %v402
        %v426 = vpack.c.b16 %v405, %v404
        %v427 = vpack.c.b16 %v407, %v406
        %v428 = vpack.c.b16 %v409, %v408
        %v429 = vpack.c.b16 %v411, %v410
        %vm430 = vcmask 64512
        %v432 = vsel %vm430, %v412, 0
        %v435 = vsel %vm430, %v413, 0
        %v438 = vsel %vm430, %v414, 0
        %v441 = vsel %vm430, %v415, 0
        %v444 = vsel %vm430, %v416, 0
        %v447 = vsel %vm430, %v417, 0
        %v450 = vsel %vm430, %v418, 0
        %v453 = vsel %vm430, %v419, 0
        %v456 = vsel %vm430, %v420, 0
        %v459 = vsel %vm430, %v421, 0
        %v462 = vsel %vm430, %v422, 0
        %v465 = vsel %vm430, %v423, 0
        %v468 = vsel %vm430, %v424, 0
        %v471 = vsel %vm430, %v425, 0
        %v474 = vsel %vm430, %v426, 0
        %v477 = vsel %vm430, %v427, 0
        %v480 = vsel %vm430, %v428, 0
        %v483 = vsel %vm430, %v429, 0
        %vm485 = vcmask 1043456
        %v487 = vsel %vm485, %v332, 0
        %489 = vmatprep.subr.bf16.mxu0 0
        %490 = vmatpush1.bf16.msra.mxu0 %v487
        %491 = vmatprep.subr.bf16.mxu0 0
        %492 = vmatpush1.bf16.msra.mxu0 0
        %493 = vmatprep.subr.bf16.mxu0 0
        %494 = vmatpush1.bf16.msra.mxu0 0
        %495 = vmatprep.subr.bf16.mxu0 0
        %496 = vmatpush1.bf16.msra.mxu0 0
        %497 = vmatprep.subr.bf16.mxu0 0
        %498 = vmatpush1.bf16.msra.mxu0 0
        %499 = vmatprep.subr.bf16.mxu0 0
        %500 = vmatpush1.bf16.msra.mxu0 0
        %501 = vmatprep.subr.bf16.mxu0 0
        %502 = vmatpush1.bf16.msra.mxu0 0
        %503 = vmatprep.subr.bf16.mxu0 0
        %504 = vmatpush1.bf16.msra.mxu0 0
        %505 = vmatprep.subr.bf16.mxu0 0
        %506 = vmatpush1.bf16.msra.mxu0 0
        %507 = vmatprep.subr.bf16.mxu0 0
        %508 = vmatpush1.bf16.msra.mxu0 0
        %509 = vmatprep.subr.bf16.mxu0 0
        %510 = vmatpush1.bf16.msra.mxu0 0
        %511 = vmatprep.subr.bf16.mxu0 0
        %512 = vmatpush1.bf16.msra.mxu0 0
        %513 = vmatprep.subr.bf16.mxu0 0
        %514 = vmatpush1.bf16.msra.mxu0 0
        %515 = vmatprep.subr.bf16.mxu0 0
        %516 = vmatpush1.bf16.msra.mxu0 0
        %517 = vmatprep.subr.bf16.mxu0 0
        %518 = vmatpush1.bf16.msra.mxu0 0
        %519 = vmatprep.subr.bf16.mxu0 0
        %520 = vmatpush1.bf16.msra.mxu0 0
        %521 = vmatprep.mubr.bf16.mxu0 0
        %522 = vmatmul.mubr.bf16.gmra.mrb[0].mxu0 %v432
        %v523 = vpop.f32.mrb[0].mxu0
        %v524 = vadd.f32 %v338, %v523
        %v525 = vpop.f32.mrb[0].mxu0
        %v526 = vpop.f32.mrb[0].mxu0
        %v527 = vadd.f32 %v338, %v526
        %v528 = vpop.f32.mrb[0].mxu0
        %529 = vmatprep.mubr.bf16.mxu0 0
        %530 = vmatmul.mubr.bf16.gmra.mrb[0].mxu0 %v435
        %v531 = vpop.f32.mrb[0].mxu0
        %v532 = vadd.f32 %v338, %v531
        %v533 = vpop.f32.mrb[0].mxu0
        %v534 = vpop.f32.mrb[0].mxu0
        %v535 = vadd.f32 %v338, %v534
        %v536 = vpop.f32.mrb[0].mxu0
        %537 = vmatprep.mubr.bf16.mxu0 0
        %538 = vmatmul.mubr.bf16.gmra.mrb[0].mxu0 %v438
        %v539 = vpop.f32.mrb[0].mxu0
        %v540 = vadd.f32 %v338, %v539
        %v541 = vpop.f32.mrb[0].mxu0
        %v542 = vpop.f32.mrb[0].mxu0
        %v543 = vadd.f32 %v338, %v542
        %v544 = vpop.f32.mrb[0].mxu0
        %545 = vmatprep.mubr.bf16.mxu0 0
        %546 = vmatmul.mubr.bf16.gmra.mrb[0].mxu0 %v441
        %v547 = vpop.f32.mrb[0].mxu0
        %v548 = vadd.f32 %v338, %v547
        %v549 = vpop.f32.mrb[0].mxu0
        %v550 = vpop.f32.mrb[0].mxu0
        %v551 = vadd.f32 %v338, %v550
        %v552 = vpop.f32.mrb[0].mxu0
        %553 = vmatprep.mubr.bf16.mxu0 0
        %554 = vmatmul.mubr.bf16.gmra.mrb[0].mxu0 %v444
        %v555 = vpop.f32.mrb[0].mxu0
        %v556 = vadd.f32 %v338, %v555
        %v557 = vpop.f32.mrb[0].mxu0
        %v558 = vpop.f32.mrb[0].mxu0
        %v559 = vadd.f32 %v338, %v558
        %v560 = vpop.f32.mrb[0].mxu0
        %561 = vmatprep.mubr.bf16.mxu0 0
        %562 = vmatmul.mubr.bf16.gmra.mrb[0].mxu0 %v447
        %v563 = vpop.f32.mrb[0].mxu0
        %v564 = vadd.f32 %v338, %v563
        %v565 = vpop.f32.mrb[0].mxu0
        %v566 = vpop.f32.mrb[0].mxu0
        %v567 = vadd.f32 %v338, %v566
        %v568 = vpop.f32.mrb[0].mxu0
        %569 = vmatprep.mubr.bf16.mxu0 0
        %570 = vmatmul.mubr.bf16.gmra.mrb[0].mxu0 %v450
        %v571 = vpop.f32.mrb[0].mxu0
        %v572 = vadd.f32 %v338, %v571
        %v573 = vpop.f32.mrb[0].mxu0
        %v574 = vpop.f32.mrb[0].mxu0
        %v575 = vadd.f32 %v338, %v574
        %v576 = vpop.f32.mrb[0].mxu0
        %577 = vmatprep.mubr.bf16.mxu0 0
        %578 = vmatmul.mubr.bf16.gmra.mrb[0].mxu0 %v453
        %v579 = vpop.f32.mrb[0].mxu0
        %v580 = vadd.f32 %v338, %v579
        %v581 = vpop.f32.mrb[0].mxu0
        %v582 = vpop.f32.mrb[0].mxu0
        %v583 = vadd.f32 %v338, %v582
        %v584 = vpop.f32.mrb[0].mxu0
        %585 = vmatprep.mubr.bf16.mxu0 0
        %586 = vmatmul.mubr.bf16.gmra.mrb[0].mxu0 %v456
        %v587 = vpop.f32.mrb[0].mxu0
        %v588 = vadd.f32 %v338, %v587
        %v589 = vpop.f32.mrb[0].mxu0
        %v590 = vpop.f32.mrb[0].mxu0
        %v591 = vadd.f32 %v338, %v590
        %v592 = vpop.f32.mrb[0].mxu0
        %593 = vmatprep.mubr.bf16.mxu0 0
        %594 = vmatmul.mubr.bf16.gmra.mrb[0].mxu0 %v459
        %v595 = vpop.f32.mrb[0].mxu0
        %v596 = vadd.f32 %v338, %v595
        %v597 = vpop.f32.mrb[0].mxu0
        %v598 = vpop.f32.mrb[0].mxu0
        %v599 = vadd.f32 %v338, %v598
        %v600 = vpop.f32.mrb[0].mxu0
        %601 = vmatprep.mubr.bf16.mxu0 0
        %602 = vmatmul.mubr.bf16.gmra.mrb[0].mxu0 %v462
        %v603 = vpop.f32.mrb[0].mxu0
        %v604 = vadd.f32 %v338, %v603
        %v605 = vpop.f32.mrb[0].mxu0
        %v606 = vpop.f32.mrb[0].mxu0
        %v607 = vadd.f32 %v338, %v606
        %v608 = vpop.f32.mrb[0].mxu0
        %609 = vmatprep.mubr.bf16.mxu0 0
        %610 = vmatmul.mubr.bf16.gmra.mrb[0].mxu0 %v465
        %v611 = vpop.f32.mrb[0].mxu0
        %v612 = vadd.f32 %v338, %v611
        %v613 = vpop.f32.mrb[0].mxu0
        %v614 = vpop.f32.mrb[0].mxu0
        %v615 = vadd.f32 %v338, %v614
        %v616 = vpop.f32.mrb[0].mxu0
        %617 = vmatprep.mubr.bf16.mxu0 0
        %618 = vmatmul.mubr.bf16.gmra.mrb[0].mxu0 %v468
        %v619 = vpop.f32.mrb[0].mxu0
        %v620 = vadd.f32 %v338, %v619
        %v621 = vpop.f32.mrb[0].mxu0
        %v622 = vpop.f32.mrb[0].mxu0
        %v623 = vadd.f32 %v338, %v622
        %v624 = vpop.f32.mrb[0].mxu0
        %625 = vmatprep.mubr.bf16.mxu0 0
        %626 = vmatmul.mubr.bf16.gmra.mrb[0].mxu0 %v471
        %v627 = vpop.f32.mrb[0].mxu0
        %v628 = vadd.f32 %v338, %v627
        %v629 = vpop.f32.mrb[0].mxu0
        %v630 = vpop.f32.mrb[0].mxu0
        %v631 = vadd.f32 %v338, %v630
        %v632 = vpop.f32.mrb[0].mxu0
        %633 = vmatprep.mubr.bf16.mxu0 0
        %634 = vmatmul.mubr.bf16.gmra.mrb[0].mxu0 %v474
        %v635 = vpop.f32.mrb[0].mxu0
        %v636 = vadd.f32 %v338, %v635
        %v637 = vpop.f32.mrb[0].mxu0
        %v638 = vpop.f32.mrb[0].mxu0
        %v639 = vadd.f32 %v338, %v638
        %v640 = vpop.f32.mrb[0].mxu0
        %641 = vmatprep.mubr.bf16.mxu0 0
        %642 = vmatmul.mubr.bf16.gmra.mrb[0].mxu0 %v477
        %v643 = vpop.f32.mrb[0].mxu0
        %v644 = vadd.f32 %v338, %v643
        %v645 = vpop.f32.mrb[0].mxu0
        %v646 = vpop.f32.mrb[0].mxu0
        %v647 = vadd.f32 %v338, %v646
        %v648 = vpop.f32.mrb[0].mxu0
        %649 = vmatprep.mubr.bf16.mxu0 0
        %650 = vmatmul.mubr.bf16.gmra.mrb[0].mxu0 %v480
        %v651 = vpop.f32.mrb[0].mxu0
        %v652 = vadd.f32 %v338, %v651
        %v653 = vpop.f32.mrb[0].mxu0
        %v654 = vpop.f32.mrb[0].mxu0
        %v655 = vadd.f32 %v338, %v654
        %v656 = vpop.f32.mrb[0].mxu0
        %657 = vmatprep.mubr.bf16.mxu0 0
        %658 = vmatmul.mubr.bf16.gmra.mrb[0].mxu0 %v483
        %v659 = vpop.f32.mrb[0].mxu0
        %v660 = vadd.f32 %v338, %v659
        %v661 = vpop.f32.mrb[0].mxu0
        %v662 = vpop.f32.mrb[0].mxu0
        %v663 = vadd.f32 %v338, %v662
        %v664 = vpop.f32.mrb[0].mxu0
        %665 = vdwg.mxu0
        %v666 = vmax.f32 %v524, 0.0
        %v667 = vmax.f32 %v527, 0.0
        %v668 = vmax.f32 %v532, 0.0
        %v669 = vmax.f32 %v535, 0.0
        %v670 = vmax.f32 %v540, 0.0
        %v671 = vmax.f32 %v543, 0.0
        %v672 = vmax.f32 %v548, 0.0
        %v673 = vmax.f32 %v551, 0.0
        %v674 = vmax.f32 %v556, 0.0
        %v675 = vmax.f32 %v559, 0.0
        %v676 = vmax.f32 %v564, 0.0
        %v677 = vmax.f32 %v567, 0.0
        %v678 = vmax.f32 %v572, 0.0
        %v679 = vmax.f32 %v575, 0.0
        %v680 = vmax.f32 %v580, 0.0
        %v681 = vmax.f32 %v583, 0.0
        %v682 = vmax.f32 %v588, 0.0
        %v683 = vmax.f32 %v591, 0.0
        %v684 = vmax.f32 %v596, 0.0
        %v685 = vmax.f32 %v599, 0.0
        %v686 = vmax.f32 %v604, 0.0
        %v687 = vmax.f32 %v607, 0.0
        %v688 = vmax.f32 %v612, 0.0
        %v689 = vmax.f32 %v615, 0.0
        %v690 = vmax.f32 %v620, 0.0
        %v691 = vmax.f32 %v623, 0.0
        %v692 = vmax.f32 %v628, 0.0
        %v693 = vmax.f32 %v631, 0.0
        %v694 = vmax.f32 %v636, 0.0
        %v695 = vmax.f32 %v639, 0.0
        %v696 = vmax.f32 %v644, 0.0
        %v697 = vmax.f32 %v647, 0.0
        %v698 = vmax.f32 %v652, 0.0
        %v699 = vmax.f32 %v655, 0.0
        %v700 = vmax.f32 %v660, 0.0
        %v701 = vmax.f32 %v663, 0.0
        %v702 = vmin.f32 %v666, 6.0
        %v703 = vmin.f32 %v667, 6.0
        %v704 = vmin.f32 %v668, 6.0
        %v705 = vmin.f32 %v669, 6.0
        %v706 = vmin.f32 %v670, 6.0
        %v707 = vmin.f32 %v671, 6.0
        %v708 = vmin.f32 %v672, 6.0
        %v709 = vmin.f32 %v673, 6.0
        %v710 = vmin.f32 %v674, 6.0
        %v711 = vmin.f32 %v675, 6.0
        %v712 = vmin.f32 %v676, 6.0
        %v713 = vmin.f32 %v677, 6.0
        %v714 = vmin.f32 %v678, 6.0
        %v715 = vmin.f32 %v679, 6.0
        %v716 = vmin.f32 %v680, 6.0
        %v717 = vmin.f32 %v681, 6.0
        %v718 = vmin.f32 %v682, 6.0
        %v719 = vmin.f32 %v683, 6.0
        %v720 = vmin.f32 %v684, 6.0
        %v721 = vmin.f32 %v685, 6.0
        %v722 = vmin.f32 %v686, 6.0
        %v723 = vmin.f32 %v687, 6.0
        %v724 = vmin.f32 %v688, 6.0
        %v725 = vmin.f32 %v689, 6.0
        %v726 = vmin.f32 %v690, 6.0
        %v727 = vmin.f32 %v691, 6.0
        %v728 = vmin.f32 %v692, 6.0
        %v729 = vmin.f32 %v693, 6.0
        %v730 = vmin.f32 %v694, 6.0
        %v731 = vmin.f32 %v695, 6.0
        %v732 = vmin.f32 %v696, 6.0
        %v733 = vmin.f32 %v697, 6.0
        %v734 = vmin.f32 %v698, 6.0
        %v735 = vmin.f32 %v699, 6.0
        %v736 = vmin.f32 %v700, 6.0
        %v737 = vmin.f32 %v701, 6.0
        %vm738 = vcmask 392192
        %739 = vst.msk [vmem:[#allocation2 + $0x8] sm:$0xff] %vm738, %v702
        %740 = vst.msk [vmem:[#allocation2 + $0x10] sm:$0xff] %vm738, %v703
        %741 = vst.msk [vmem:[#allocation2 + $0x28] sm:$0xff] %vm738, %v704
        %742 = vst.msk [vmem:[#allocation2 + $0x30] sm:$0xff] %vm738, %v705
        %743 = vst.msk [vmem:[#allocation2 + $0x48] sm:$0xff] %vm738, %v706
        %744 = vst.msk [vmem:[#allocation2 + $0x50] sm:$0xff] %vm738, %v707
        %745 = vst.msk [vmem:[#allocation2 + $0x68] sm:$0xff] %vm738, %v708
        %746 = vst.msk [vmem:[#allocation2 + $0x70] sm:$0xff] %vm738, %v709
        %747 = vst.msk [vmem:[#allocation2 + $0x88] sm:$0xff] %vm738, %v710
        %748 = vst.msk [vmem:[#allocation2 + $0x90] sm:$0xff] %vm738, %v711
        %749 = vst.msk [vmem:[#allocation2 + $0xa8] sm:$0xff] %vm738, %v712
        %750 = vst.msk [vmem:[#allocation2 + $0xb0] sm:$0xff] %vm738, %v713
        %751 = vst.msk [vmem:[#allocation2 + $0xc8] sm:$0xff] %vm738, %v714
        %752 = vst.msk [vmem:[#allocation2 + $0xd0] sm:$0xff] %vm738, %v715
        %753 = vst.msk [vmem:[#allocation2 + $0xe8] sm:$0xff] %vm738, %v716
        %754 = vst.msk [vmem:[#allocation2 + $0xf0] sm:$0xff] %vm738, %v717
        %755 = vst.msk [vmem:[#allocation2 + $0x108] sm:$0xff] %vm738, %v718
        %756 = vst.msk [vmem:[#allocation2 + $0x110] sm:$0xff] %vm738, %v719
        %757 = vst.msk [vmem:[#allocation2 + $0x128] sm:$0xff] %vm738, %v720
        %758 = vst.msk [vmem:[#allocation2 + $0x130] sm:$0xff] %vm738, %v721
        %759 = vst.msk [vmem:[#allocation2 + $0x148] sm:$0xff] %vm738, %v722
        %760 = vst.msk [vmem:[#allocation2 + $0x150] sm:$0xff] %vm738, %v723
        %761 = vst.msk [vmem:[#allocation2 + $0x168] sm:$0xff] %vm738, %v724
        %762 = vst.msk [vmem:[#allocation2 + $0x170] sm:$0xff] %vm738, %v725
        %763 = vst.msk [vmem:[#allocation2 + $0x188] sm:$0xff] %vm738, %v726
        %764 = vst.msk [vmem:[#allocation2 + $0x190] sm:$0xff] %vm738, %v727
        %765 = vst.msk [vmem:[#allocation2 + $0x1a8] sm:$0xff] %vm738, %v728
        %766 = vst.msk [vmem:[#allocation2 + $0x1b0] sm:$0xff] %vm738, %v729
        %767 = vst.msk [vmem:[#allocation2 + $0x1c8] sm:$0xff] %vm738, %v730
        %768 = vst.msk [vmem:[#allocation2 + $0x1d0] sm:$0xff] %vm738, %v731
        %769 = vst.msk [vmem:[#allocation2 + $0x1e8] sm:$0xff] %vm738, %v732
        %770 = vst.msk [vmem:[#allocation2 + $0x1f0] sm:$0xff] %vm738, %v733
        %771 = vst.msk [vmem:[#allocation2 + $0x208] sm:$0xff] %vm738, %v734
        %772 = vst.msk [vmem:[#allocation2 + $0x210] sm:$0xff] %vm738, %v735
        %773 = vst.msk [vmem:[#allocation2 + $0x228] sm:$0xff] %vm738, %v736
        %774 = vst.msk [vmem:[#allocation2 + $0x230] sm:$0xff] %vm738, %v737
        %vm775 = vcmask 385024
        %776 = vst.msk [vmem:[#allocation2 + $0x7] sm:$0x1] %vm775, 0.0
        %777 = vst.msk [vmem:[#allocation2 + $0x27] sm:$0x1] %vm775, 0.0
        %778 = vst.msk [vmem:[#allocation2 + $0x47] sm:$0x1] %vm775, 0.0
        %779 = vst.msk [vmem:[#allocation2 + $0x67] sm:$0x1] %vm775, 0.0
        %780 = vst.msk [vmem:[#allocation2 + $0x87] sm:$0x1] %vm775, 0.0
        %781 = vst.msk [vmem:[#allocation2 + $0xa7] sm:$0x1] %vm775, 0.0
        %782 = vst.msk [vmem:[#allocation2 + $0xc7] sm:$0x1] %vm775, 0.0
        %783 = vst.msk [vmem:[#allocation2 + $0xe7] sm:$0x1] %vm775, 0.0
        %784 = vst.msk [vmem:[#allocation2 + $0x107] sm:$0x1] %vm775, 0.0
        %785 = vst.msk [vmem:[#allocation2 + $0x127] sm:$0x1] %vm775, 0.0
        %786 = vst.msk [vmem:[#allocation2 + $0x147] sm:$0x1] %vm775, 0.0
        %787 = vst.msk [vmem:[#allocation2 + $0x167] sm:$0x1] %vm775, 0.0
        %788 = vst.msk [vmem:[#allocation2 + $0x187] sm:$0x1] %vm775, 0.0
        %789 = vst.msk [vmem:[#allocation2 + $0x1a7] sm:$0x1] %vm775, 0.0
        %790 = vst.msk [vmem:[#allocation2 + $0x1c7] sm:$0x1] %vm775, 0.0
        %791 = vst.msk [vmem:[#allocation2 + $0x1e7] sm:$0x1] %vm775, 0.0
        %792 = vst.msk [vmem:[#allocation2 + $0x207] sm:$0x1] %vm775, 0.0
        %793 = vst.msk [vmem:[#allocation2 + $0x227] sm:$0x1] %vm775, 0.0
        %794 = vst.msk [vmem:[#allocation2 + $0x18] sm:$0x1] %vm775, 0.0
        %795 = vst.msk [vmem:[#allocation2 + $0x38] sm:$0x1] %vm775, 0.0
        %796 = vst.msk [vmem:[#allocation2 + $0x58] sm:$0x1] %vm775, 0.0
        %797 = vst.msk [vmem:[#allocation2 + $0x78] sm:$0x1] %vm775, 0.0
        %798 = vst.msk [vmem:[#allocation2 + $0x98] sm:$0x1] %vm775, 0.0
        %799 = vst.msk [vmem:[#allocation2 + $0xb8] sm:$0x1] %vm775, 0.0
        %800 = vst.msk [vmem:[#allocation2 + $0xd8] sm:$0x1] %vm775, 0.0
        %801 = vst.msk [vmem:[#allocation2 + $0xf8] sm:$0x1] %vm775, 0.0
        %802 = vst.msk [vmem:[#allocation2 + $0x118] sm:$0x1] %vm775, 0.0
        %803 = vst.msk [vmem:[#allocation2 + $0x138] sm:$0x1] %vm775, 0.0
        %804 = vst.msk [vmem:[#allocation2 + $0x158] sm:$0x1] %vm775, 0.0
        %805 = vst.msk [vmem:[#allocation2 + $0x178] sm:$0x1] %vm775, 0.0
        %806 = vst.msk [vmem:[#allocation2 + $0x198] sm:$0x1] %vm775, 0.0
        %807 = vst.msk [vmem:[#allocation2 + $0x1b8] sm:$0x1] %vm775, 0.0
        %808 = vst.msk [vmem:[#allocation2 + $0x1d8] sm:$0x1] %vm775, 0.0
        %809 = vst.msk [vmem:[#allocation2 + $0x1f8] sm:$0x1] %vm775, 0.0
        %810 = vst.msk [vmem:[#allocation2 + $0x218] sm:$0x1] %vm775, 0.0
        %811 = vst.msk [vmem:[#allocation2 + $0x238] sm:$0x1] %vm775, 0.0
        %p812 = scmp.eq.s32.totalorder %s26, 0
        // Predicated region
        $region49: #{tpu_custom_call.1} parent=47 // pred_check
          %p813 = pneg %p812
        $region50: #{tpu_custom_call.1} parent=47 // pred_check_branch
          %815 = sbr.rel (%p813) target = $region52
        $region51: #{tpu_custom_call.1} parent=47 // pred_region
          %816 = vst.msk [vmem:[#allocation2] sm:$0xff] %vm738, 0.0
          %817 = vst.msk [vmem:[#allocation2 + $0x8] sm:$0xff] %vm738, 0.0
          %818 = vst.msk [vmem:[#allocation2 + $0x10] sm:$0xff] %vm738, 0.0
          %819 = vst.msk [vmem:[#allocation2 + $0x18] sm:$0xff] %vm738, 0.0
          %s820 = scalar_lea.vmem [#allocation2], 544
          %821 = vst.msk [vmem:[%s820] sm:$0xff] %vm738, 0.0
          %822 = vst.msk [vmem:[%s820 + $0x8] sm:$0xff] %vm738, 0.0
          %823 = vst.msk [vmem:[%s820 + $0x10] sm:$0xff] %vm738, 0.0
          %824 = vst.msk [vmem:[%s820 + $0x18] sm:$0xff] %vm738, 0.0
        $region52: #{tpu_custom_call.1} parent=47 // pred_fallthru
          _
        %v825 = vld [vmem:[#allocation2 + $0x7] sm:$0xff]
        %v826 = vld [vmem:[#allocation2 + $0xf] sm:$0xff]
        %v827 = vld [vmem:[#allocation2 + $0x27] sm:$0xff]
        %v828 = vld [vmem:[#allocation2 + $0x2f] sm:$0xff]
        %v829 = vld [vmem:[#allocation2 + $0x47] sm:$0xff]
        %v830 = vld [vmem:[#allocation2 + $0x4f] sm:$0xff]
        %v831 = vld [vmem:[#allocation2 + $0x67] sm:$0xff]
        %v832 = vld [vmem:[#allocation2 + $0x6f] sm:$0xff]
        %v833 = vld [vmem:[#allocation2 + $0x87] sm:$0xff]
        %v834 = vld [vmem:[#allocation2 + $0x8f] sm:$0xff]
        %v835 = vld [vmem:[#allocation2 + $0xa7] sm:$0xff]
        %v836 = vld [vmem:[#allocation2 + $0xaf] sm:$0xff]
        %v837 = vld [vmem:[#allocation2 + $0xc7] sm:$0xff]
        %v838 = vld [vmem:[#allocation2 + $0xcf] sm:$0xff]
        %v839 = vld [vmem:[#allocation2 + $0xe7] sm:$0xff]
        %v840 = vld [vmem:[#allocation2 + $0xef] sm:$0xff]
        %v841 = vld [vmem:[#allocation2 + $0x107] sm:$0xff]
        %v842 = vld [vmem:[#allocation2 + $0x10f] sm:$0xff]
        %v843 = vld [vmem:[#allocation2 + $0x127] sm:$0xff]
        %v844 = vld [vmem:[#allocation2 + $0x12f] sm:$0xff]
        %v845 = vld [vmem:[#allocation2 + $0x147] sm:$0xff]
        %v846 = vld [vmem:[#allocation2 + $0x14f] sm:$0xff]
        %v847 = vld [vmem:[#allocation2 + $0x167] sm:$0xff]
        %v848 = vld [vmem:[#allocation2 + $0x16f] sm:$0xff]
        %v849 = vld [vmem:[#allocation2 + $0x187] sm:$0xff]
        %v850 = vld [vmem:[#allocation2 + $0x18f] sm:$0xff]
        %v851 = vld [vmem:[#allocation2 + $0x1a7] sm:$0xff]
        %v852 = vld [vmem:[#allocation2 + $0x1af] sm:$0xff]
        %v853 = vld [vmem:[#allocation2 + $0x1c7] sm:$0xff]
        %v854 = vld [vmem:[#allocation2 + $0x1cf] sm:$0xff]
        %v855 = vld [vmem:[#allocation2 + $0x1e7] sm:$0xff]
        %v856 = vld [vmem:[#allocation2 + $0x1ef] sm:$0xff]
        %v857 = vld [vmem:[#allocation2 + $0x207] sm:$0xff]
        %v858 = vld [vmem:[#allocation2 + $0x20f] sm:$0xff]
        %v859 = vld [vmem:[#allocation2 + $0x227] sm:$0xff]
        %v860 = vld [vmem:[#allocation2 + $0x22f] sm:$0xff]
        %v861 = vld [vmem:[%s3] sm:$0x1]
        %v862 = vlaneseq
        %v863 = vshrl.u32 %v862, 7
        %v864 = vsub.s32 0, %v863
        %v865 = vrot.slane %v861, %v864
        %v866 = vmul.f32 %v825, %v865
        %v867 = vmul.f32 %v826, %v865
        %v868 = vmul.f32 %v827, %v865
        %v869 = vmul.f32 %v828, %v865
        %v870 = vmul.f32 %v829, %v865
        %v871 = vmul.f32 %v830, %v865
        %v872 = vmul.f32 %v831, %v865
        %v873 = vmul.f32 %v832, %v865
        %v874 = vmul.f32 %v833, %v865
        %v875 = vmul.f32 %v834, %v865
        %v876 = vmul.f32 %v835, %v865
        %v877 = vmul.f32 %v836, %v865
        %v878 = vmul.f32 %v837, %v865
        %v879 = vmul.f32 %v838, %v865
        %v880 = vmul.f32 %v839, %v865
        %v881 = vmul.f32 %v840, %v865
        %v882 = vmul.f32 %v841, %v865
        %v883 = vmul.f32 %v842, %v865
        %v884 = vmul.f32 %v843, %v865
        %v885 = vmul.f32 %v844, %v865
        %v886 = vmul.f32 %v845, %v865
        %v887 = vmul.f32 %v846, %v865
        %v888 = vmul.f32 %v847, %v865
        %v889 = vmul.f32 %v848, %v865
        %v890 = vmul.f32 %v849, %v865
        %v891 = vmul.f32 %v850, %v865
        %v892 = vmul.f32 %v851, %v865
        %v893 = vmul.f32 %v852, %v865
        %v894 = vmul.f32 %v853, %v865
        %v895 = vmul.f32 %v854, %v865
        %v896 = vmul.f32 %v855, %v865
        %v897 = vmul.f32 %v856, %v865
        %v898 = vadd.f32 %v866, 0.0
        %v899 = vadd.f32 %v867, 0.0
        %v900 = vadd.f32 %v868, 0.0
        %v901 = vadd.f32 %v869, 0.0
        %v902 = vadd.f32 %v870, 0.0
        %v903 = vadd.f32 %v871, 0.0
        %v904 = vadd.f32 %v872, 0.0
        %v905 = vadd.f32 %v873, 0.0
        %v906 = vadd.f32 %v874, 0.0
        %v907 = vadd.f32 %v875, 0.0
        %v908 = vadd.f32 %v876, 0.0
        %v909 = vadd.f32 %v877, 0.0
        %v910 = vadd.f32 %v878, 0.0
        %v911 = vadd.f32 %v879, 0.0
        %v912 = vadd.f32 %v880, 0.0
        %v913 = vadd.f32 %v881, 0.0
        %v914 = vadd.f32 %v882, 0.0
        %v915 = vadd.f32 %v883, 0.0
        %v916 = vadd.f32 %v884, 0.0
        %v917 = vadd.f32 %v885, 0.0
        %v918 = vadd.f32 %v886, 0.0
        %v919 = vadd.f32 %v887, 0.0
        %v920 = vadd.f32 %v888, 0.0
        %v921 = vadd.f32 %v889, 0.0
        %v922 = vadd.f32 %v890, 0.0
        %v923 = vadd.f32 %v891, 0.0
        %v924 = vadd.f32 %v892, 0.0
        %v925 = vadd.f32 %v893, 0.0
        %v926 = vadd.f32 %v894, 0.0
        %v927 = vadd.f32 %v895, 0.0
        %v928 = vadd.f32 %v896, 0.0
        %v929 = vadd.f32 %v897, 0.0
        %s930 = scalar_lea.vmem %s3, 4
        %v931 = vld [vmem:[%s930] sm:$0x1]
        %v932 = vlaneseq
        %v933 = vshrl.u32 %v932, 7
        %v934 = vsub.s32 0, %v933
        %v935 = vrot.slane %v931, %v934
        %v936 = vmul.f32 %v827, %v935
        %v937 = vmul.f32 %v828, %v935
        %v938 = vmul.f32 %v829, %v935
        %v939 = vmul.f32 %v830, %v935
        %v940 = vmul.f32 %v831, %v935
        %v941 = vmul.f32 %v832, %v935
        %v942 = vmul.f32 %v833, %v935
        %v943 = vmul.f32 %v834, %v935
        %v944 = vmul.f32 %v835, %v935
        %v945 = vmul.f32 %v836, %v935
        %v946 = vmul.f32 %v837, %v935
        %v947 = vmul.f32 %v838, %v935
        %v948 = vmul.f32 %v839, %v935
        %v949 = vmul.f32 %v840, %v935
        %v950 = vmul.f32 %v841, %v935
        %v951 = vmul.f32 %v842, %v935
        %v952 = vmul.f32 %v843, %v935
        %v953 = vmul.f32 %v844, %v935
        %v954 = vmul.f32 %v845, %v935
        %v955 = vmul.f32 %v846, %v935
        %v956 = vmul.f32 %v847, %v935
        %v957 = vmul.f32 %v848, %v935
        %v958 = vmul.f32 %v849, %v935
        %v959 = vmul.f32 %v850, %v935
        %v960 = vmul.f32 %v851, %v935
        %v961 = vmul.f32 %v852, %v935
        %v962 = vmul.f32 %v853, %v935
        %v963 = vmul.f32 %v854, %v935
        %v964 = vmul.f32 %v855, %v935
        %v965 = vmul.f32 %v856, %v935
        %v966 = vmul.f32 %v857, %v935
        %v967 = vmul.f32 %v858, %v935
        %v968 = vadd.f32 %v898, %v936
        %v969 = vadd.f32 %v899, %v937
        %v970 = vadd.f32 %v900, %v938
        %v971 = vadd.f32 %v901, %v939
        %v972 = vadd.f32 %v902, %v940
        %v973 = vadd.f32 %v903, %v941
        %v974 = vadd.f32 %v904, %v942
        %v975 = vadd.f32 %v905, %v943
        %v976 = vadd.f32 %v906, %v944
        %v977 = vadd.f32 %v907, %v945
        %v978 = vadd.f32 %v908, %v946
        %v979 = vadd.f32 %v909, %v947
        %v980 = vadd.f32 %v910, %v948
        %v981 = vadd.f32 %v911, %v949
        %v982 = vadd.f32 %v912, %v950
        %v983 = vadd.f32 %v913, %v951
        %v984 = vadd.f32 %v914, %v952
        %v985 = vadd.f32 %v915, %v953
        %v986 = vadd.f32 %v916, %v954
        %v987 = vadd.f32 %v917, %v955
        %v988 = vadd.f32 %v918, %v956
        %v989 = vadd.f32 %v919, %v957
        %v990 = vadd.f32 %v920, %v958
        %v991 = vadd.f32 %v921, %v959
        %v992 = vadd.f32 %v922, %v960
        %v993 = vadd.f32 %v923, %v961
        %v994 = vadd.f32 %v924, %v962
        %v995 = vadd.f32 %v925, %v963
        %v996 = vadd.f32 %v926, %v964
        %v997 = vadd.f32 %v927, %v965
        %v998 = vadd.f32 %v928, %v966
        %v999 = vadd.f32 %v929, %v967
        %s1000 = scalar_lea.vmem %s3, 8
        %v1001 = vld [vmem:[%s1000] sm:$0x1]
        %v1002 = vlaneseq
        %v1003 = vshrl.u32 %v1002, 7
        %v1004 = vsub.s32 0, %v1003
        %v1005 = vrot.slane %v1001, %v1004
        %v1006 = vmul.f32 %v829, %v1005
        %v1007 = vmul.f32 %v830, %v1005
        %v1008 = vmul.f32 %v831, %v1005
        %v1009 = vmul.f32 %v832, %v1005
        %v1010 = vmul.f32 %v833, %v1005
        %v1011 = vmul.f32 %v834, %v1005
        %v1012 = vmul.f32 %v835, %v1005
        %v1013 = vmul.f32 %v836, %v1005
        %v1014 = vmul.f32 %v837, %v1005
        %v1015 = vmul.f32 %v838, %v1005
        %v1016 = vmul.f32 %v839, %v1005
        %v1017 = vmul.f32 %v840, %v1005
        %v1018 = vmul.f32 %v841, %v1005
        %v1019 = vmul.f32 %v842, %v1005
        %v1020 = vmul.f32 %v843, %v1005
        %v1021 = vmul.f32 %v844, %v1005
        %v1022 = vmul.f32 %v845, %v1005
        %v1023 = vmul.f32 %v846, %v1005
        %v1024 = vmul.f32 %v847, %v1005
        %v1025 = vmul.f32 %v848, %v1005
        %v1026 = vmul.f32 %v849, %v1005
        %v1027 = vmul.f32 %v850, %v1005
        %v1028 = vmul.f32 %v851, %v1005
        %v1029 = vmul.f32 %v852, %v1005
        %v1030 = vmul.f32 %v853, %v1005
        %v1031 = vmul.f32 %v854, %v1005
        %v1032 = vmul.f32 %v855, %v1005
        %v1033 = vmul.f32 %v856, %v1005
        %v1034 = vmul.f32 %v857, %v1005
        %v1035 = vmul.f32 %v858, %v1005
        %v1036 = vmul.f32 %v859, %v1005
        %v1037 = vmul.f32 %v860, %v1005
        %v1038 = vadd.f32 %v968, %v1006
        %v1039 = vadd.f32 %v969, %v1007
        %v1040 = vadd.f32 %v970, %v1008
        %v1041 = vadd.f32 %v971, %v1009
        %v1042 = vadd.f32 %v972, %v1010
        %v1043 = vadd.f32 %v973, %v1011
        %v1044 = vadd.f32 %v974, %v1012
        %v1045 = vadd.f32 %v975, %v1013
        %v1046 = vadd.f32 %v976, %v1014
        %v1047 = vadd.f32 %v977, %v1015
        %v1048 = vadd.f32 %v978, %v1016
        %v1049 = vadd.f32 %v979, %v1017
        %v1050 = vadd.f32 %v980, %v1018
        %v1051 = vadd.f32 %v981, %v1019
        %v1052 = vadd.f32 %v982, %v1020
        %v1053 = vadd.f32 %v983, %v1021
        %v1054 = vadd.f32 %v984, %v1022
        %v1055 = vadd.f32 %v985, %v1023
        %v1056 = vadd.f32 %v986, %v1024
        %v1057 = vadd.f32 %v987, %v1025
        %v1058 = vadd.f32 %v988, %v1026
        %v1059 = vadd.f32 %v989, %v1027
        %v1060 = vadd.f32 %v990, %v1028
        %v1061 = vadd.f32 %v991, %v1029
        %v1062 = vadd.f32 %v992, %v1030
        %v1063 = vadd.f32 %v993, %v1031
        %v1064 = vadd.f32 %v994, %v1032
        %v1065 = vadd.f32 %v995, %v1033
        %v1066 = vadd.f32 %v996, %v1034
        %v1067 = vadd.f32 %v997, %v1035
        %v1068 = vadd.f32 %v998, %v1036
        %v1069 = vadd.f32 %v999, %v1037
        %v1070 = vld [vmem:[#allocation2 + $0x8] sm:$0xff]
        %v1071 = vld [vmem:[#allocation2 + $0x10] sm:$0xff]
        %v1072 = vld [vmem:[#allocation2 + $0x28] sm:$0xff]
        %v1073 = vld [vmem:[#allocation2 + $0x30] sm:$0xff]
        %v1074 = vld [vmem:[#allocation2 + $0x48] sm:$0xff]
        %v1075 = vld [vmem:[#allocation2 + $0x50] sm:$0xff]
        %v1076 = vld [vmem:[#allocation2 + $0x68] sm:$0xff]
        %v1077 = vld [vmem:[#allocation2 + $0x70] sm:$0xff]
        %v1078 = vld [vmem:[#allocation2 + $0x88] sm:$0xff]
        %v1079 = vld [vmem:[#allocation2 + $0x90] sm:$0xff]
        %v1080 = vld [vmem:[#allocation2 + $0xa8] sm:$0xff]
        %v1081 = vld [vmem:[#allocation2 + $0xb0] sm:$0xff]
        %v1082 = vld [vmem:[#allocation2 + $0xc8] sm:$0xff]
        %v1083 = vld [vmem:[#allocation2 + $0xd0] sm:$0xff]
        %v1084 = vld [vmem:[#allocation2 + $0xe8] sm:$0xff]
        %v1085 = vld [vmem:[#allocation2 + $0xf0] sm:$0xff]
        %v1086 = vld [vmem:[#allocation2 + $0x108] sm:$0xff]
        %v1087 = vld [vmem:[#allocation2 + $0x110] sm:$0xff]
        %v1088 = vld [vmem:[#allocation2 + $0x128] sm:$0xff]
        %v1089 = vld [vmem:[#allocation2 + $0x130] sm:$0xff]
        %v1090 = vld [vmem:[#allocation2 + $0x148] sm:$0xff]
        %v1091 = vld [vmem:[#allocation2 + $0x150] sm:$0xff]
        %v1092 = vld [vmem:[#allocation2 + $0x168] sm:$0xff]
        %v1093 = vld [vmem:[#allocation2 + $0x170] sm:$0xff]
        %v1094 = vld [vmem:[#allocation2 + $0x188] sm:$0xff]
        %v1095 = vld [vmem:[#allocation2 + $0x190] sm:$0xff]
        %v1096 = vld [vmem:[#allocation2 + $0x1a8] sm:$0xff]
        %v1097 = vld [vmem:[#allocation2 + $0x1b0] sm:$0xff]
        %v1098 = vld [vmem:[#allocation2 + $0x1c8] sm:$0xff]
        %v1099 = vld [vmem:[#allocation2 + $0x1d0] sm:$0xff]
        %v1100 = vld [vmem:[#allocation2 + $0x1e8] sm:$0xff]
        %v1101 = vld [vmem:[#allocation2 + $0x1f0] sm:$0xff]
        %v1102 = vld [vmem:[#allocation2 + $0x208] sm:$0xff]
        %v1103 = vld [vmem:[#allocation2 + $0x210] sm:$0xff]
        %v1104 = vld [vmem:[#allocation2 + $0x228] sm:$0xff]
        %v1105 = vld [vmem:[#allocation2 + $0x230] sm:$0xff]
        %v1106 = vld [vmem:[%s3 + $0x1] sm:$0x1]
        %v1107 = vlaneseq
        %v1108 = vshrl.u32 %v1107, 7
        %v1109 = vsub.s32 0, %v1108
        %v1110 = vrot.slane %v1106, %v1109
        %v1111 = vmul.f32 %v1070, %v1110
        %v1112 = vmul.f32 %v1071, %v1110
        %v1113 = vmul.f32 %v1072, %v1110
        %v1114 = vmul.f32 %v1073, %v1110
        %v1115 = vmul.f32 %v1074, %v1110
        %v1116 = vmul.f32 %v1075, %v1110
        %v1117 = vmul.f32 %v1076, %v1110
        %v1118 = vmul.f32 %v1077, %v1110
        %v1119 = vmul.f32 %v1078, %v1110
        %v1120 = vmul.f32 %v1079, %v1110
        %v1121 = vmul.f32 %v1080, %v1110
        %v1122 = vmul.f32 %v1081, %v1110
        %v1123 = vmul.f32 %v1082, %v1110
        %v1124 = vmul.f32 %v1083, %v1110
        %v1125 = vmul.f32 %v1084, %v1110
        %v1126 = vmul.f32 %v1085, %v1110
        %v1127 = vmul.f32 %v1086, %v1110
        %v1128 = vmul.f32 %v1087, %v1110
        %v1129 = vmul.f32 %v1088, %v1110
        %v1130 = vmul.f32 %v1089, %v1110
        %v1131 = vmul.f32 %v1090, %v1110
        %v1132 = vmul.f32 %v1091, %v1110
        %v1133 = vmul.f32 %v1092, %v1110
        %v1134 = vmul.f32 %v1093, %v1110
        %v1135 = vmul.f32 %v1094, %v1110
        %v1136 = vmul.f32 %v1095, %v1110
        %v1137 = vmul.f32 %v1096, %v1110
        %v1138 = vmul.f32 %v1097, %v1110
        %v1139 = vmul.f32 %v1098, %v1110
        %v1140 = vmul.f32 %v1099, %v1110
        %v1141 = vmul.f32 %v1100, %v1110
        %v1142 = vmul.f32 %v1101, %v1110
        %v1143 = vadd.f32 %v1038, %v1111
        %v1144 = vadd.f32 %v1039, %v1112
        %v1145 = vadd.f32 %v1040, %v1113
        %v1146 = vadd.f32 %v1041, %v1114
        %v1147 = vadd.f32 %v1042, %v1115
        %v1148 = vadd.f32 %v1043, %v1116
        %v1149 = vadd.f32 %v1044, %v1117
        %v1150 = vadd.f32 %v1045, %v1118
        %v1151 = vadd.f32 %v1046, %v1119
        %v1152 = vadd.f32 %v1047, %v1120
        %v1153 = vadd.f32 %v1048, %v1121
        %v1154 = vadd.f32 %v1049, %v1122
        %v1155 = vadd.f32 %v1050, %v1123
        %v1156 = vadd.f32 %v1051, %v1124
        %v1157 = vadd.f32 %v1052, %v1125
        %v1158 = vadd.f32 %v1053, %v1126
        %v1159 = vadd.f32 %v1054, %v1127
        %v1160 = vadd.f32 %v1055, %v1128
        %v1161 = vadd.f32 %v1056, %v1129
        %v1162 = vadd.f32 %v1057, %v1130
        %v1163 = vadd.f32 %v1058, %v1131
        %v1164 = vadd.f32 %v1059, %v1132
        %v1165 = vadd.f32 %v1060, %v1133
        %v1166 = vadd.f32 %v1061, %v1134
        %v1167 = vadd.f32 %v1062, %v1135
        %v1168 = vadd.f32 %v1063, %v1136
        %v1169 = vadd.f32 %v1064, %v1137
        %v1170 = vadd.f32 %v1065, %v1138
        %v1171 = vadd.f32 %v1066, %v1139
        %v1172 = vadd.f32 %v1067, %v1140
        %v1173 = vadd.f32 %v1068, %v1141
        %v1174 = vadd.f32 %v1069, %v1142
        %v1175 = vld [vmem:[%s930 + $0x1] sm:$0x1]
        %v1176 = vlaneseq
        %v1177 = vshrl.u32 %v1176, 7
        %v1178 = vsub.s32 0, %v1177
        %v1179 = vrot.slane %v1175, %v1178
        %v1180 = vmul.f32 %v1072, %v1179
        %v1181 = vmul.f32 %v1073, %v1179
        %v1182 = vmul.f32 %v1074, %v1179
        %v1183 = vmul.f32 %v1075, %v1179
        %v1184 = vmul.f32 %v1076, %v1179
        %v1185 = vmul.f32 %v1077, %v1179
        %v1186 = vmul.f32 %v1078, %v1179
        %v1187 = vmul.f32 %v1079, %v1179
        %v1188 = vmul.f32 %v1080, %v1179
        %v1189 = vmul.f32 %v1081, %v1179
        %v1190 = vmul.f32 %v1082, %v1179
        %v1191 = vmul.f32 %v1083, %v1179
        %v1192 = vmul.f32 %v1084, %v1179
        %v1193 = vmul.f32 %v1085, %v1179
        %v1194 = vmul.f32 %v1086, %v1179
        %v1195 = vmul.f32 %v1087, %v1179
        %v1196 = vmul.f32 %v1088, %v1179
        %v1197 = vmul.f32 %v1089, %v1179
        %v1198 = vmul.f32 %v1090, %v1179
        %v1199 = vmul.f32 %v1091, %v1179
        %v1200 = vmul.f32 %v1092, %v1179
        %v1201 = vmul.f32 %v1093, %v1179
        %v1202 = vmul.f32 %v1094, %v1179
        %v1203 = vmul.f32 %v1095, %v1179
        %v1204 = vmul.f32 %v1096, %v1179
        %v1205 = vmul.f32 %v1097, %v1179
        %v1206 = vmul.f32 %v1098, %v1179
        %v1207 = vmul.f32 %v1099, %v1179
        %v1208 = vmul.f32 %v1100, %v1179
        %v1209 = vmul.f32 %v1101, %v1179
        %v1210 = vmul.f32 %v1102, %v1179
        %v1211 = vmul.f32 %v1103, %v1179
        %v1212 = vadd.f32 %v1143, %v1180
        %v1213 = vadd.f32 %v1144, %v1181
        %v1214 = vadd.f32 %v1145, %v1182
        %v1215 = vadd.f32 %v1146, %v1183
        %v1216 = vadd.f32 %v1147, %v1184
        %v1217 = vadd.f32 %v1148, %v1185
        %v1218 = vadd.f32 %v1149, %v1186
        %v1219 = vadd.f32 %v1150, %v1187
        %v1220 = vadd.f32 %v1151, %v1188
        %v1221 = vadd.f32 %v1152, %v1189
        %v1222 = vadd.f32 %v1153, %v1190
        %v1223 = vadd.f32 %v1154, %v1191
        %v1224 = vadd.f32 %v1155, %v1192
        %v1225 = vadd.f32 %v1156, %v1193
        %v1226 = vadd.f32 %v1157, %v1194
        %v1227 = vadd.f32 %v1158, %v1195
        %v1228 = vadd.f32 %v1159, %v1196
        %v1229 = vadd.f32 %v1160, %v1197
        %v1230 = vadd.f32 %v1161, %v1198
        %v1231 = vadd.f32 %v1162, %v1199
        %v1232 = vadd.f32 %v1163, %v1200
        %v1233 = vadd.f32 %v1164, %v1201
        %v1234 = vadd.f32 %v1165, %v1202
        %v1235 = vadd.f32 %v1166, %v1203
        %v1236 = vadd.f32 %v1167, %v1204
        %v1237 = vadd.f32 %v1168, %v1205
        %v1238 = vadd.f32 %v1169, %v1206
        %v1239 = vadd.f32 %v1170, %v1207
        %v1240 = vadd.f32 %v1171, %v1208
        %v1241 = vadd.f32 %v1172, %v1209
        %v1242 = vadd.f32 %v1173, %v1210
        %v1243 = vadd.f32 %v1174, %v1211
        %v1244 = vld [vmem:[%s1000 + $0x1] sm:$0x1]
        %v1245 = vlaneseq
        %v1246 = vshrl.u32 %v1245, 7
        %v1247 = vsub.s32 0, %v1246
        %v1248 = vrot.slane %v1244, %v1247
        %v1249 = vmul.f32 %v1074, %v1248
        %v1250 = vmul.f32 %v1075, %v1248
        %v1251 = vmul.f32 %v1076, %v1248
        %v1252 = vmul.f32 %v1077, %v1248
        %v1253 = vmul.f32 %v1078, %v1248
        %v1254 = vmul.f32 %v1079, %v1248
        %v1255 = vmul.f32 %v1080, %v1248
        %v1256 = vmul.f32 %v1081, %v1248
        %v1257 = vmul.f32 %v1082, %v1248
        %v1258 = vmul.f32 %v1083, %v1248
        %v1259 = vmul.f32 %v1084, %v1248
        %v1260 = vmul.f32 %v1085, %v1248
        %v1261 = vmul.f32 %v1086, %v1248
        %v1262 = vmul.f32 %v1087, %v1248
        %v1263 = vmul.f32 %v1088, %v1248
        %v1264 = vmul.f32 %v1089, %v1248
        %v1265 = vmul.f32 %v1090, %v1248
        %v1266 = vmul.f32 %v1091, %v1248
        %v1267 = vmul.f32 %v1092, %v1248
        %v1268 = vmul.f32 %v1093, %v1248
        %v1269 = vmul.f32 %v1094, %v1248
        %v1270 = vmul.f32 %v1095, %v1248
        %v1271 = vmul.f32 %v1096, %v1248
        %v1272 = vmul.f32 %v1097, %v1248
        %v1273 = vmul.f32 %v1098, %v1248
        %v1274 = vmul.f32 %v1099, %v1248
        %v1275 = vmul.f32 %v1100, %v1248
        %v1276 = vmul.f32 %v1101, %v1248
        %v1277 = vmul.f32 %v1102, %v1248
        %v1278 = vmul.f32 %v1103, %v1248
        %v1279 = vmul.f32 %v1104, %v1248
        %v1280 = vmul.f32 %v1105, %v1248
        %v1281 = vadd.f32 %v1212, %v1249
        %v1282 = vadd.f32 %v1213, %v1250
        %v1283 = vadd.f32 %v1214, %v1251
        %v1284 = vadd.f32 %v1215, %v1252
        %v1285 = vadd.f32 %v1216, %v1253
        %v1286 = vadd.f32 %v1217, %v1254
        %v1287 = vadd.f32 %v1218, %v1255
        %v1288 = vadd.f32 %v1219, %v1256
        %v1289 = vadd.f32 %v1220, %v1257
        %v1290 = vadd.f32 %v1221, %v1258
        %v1291 = vadd.f32 %v1222, %v1259
        %v1292 = vadd.f32 %v1223, %v1260
        %v1293 = vadd.f32 %v1224, %v1261
        %v1294 = vadd.f32 %v1225, %v1262
        %v1295 = vadd.f32 %v1226, %v1263
        %v1296 = vadd.f32 %v1227, %v1264
        %v1297 = vadd.f32 %v1228, %v1265
        %v1298 = vadd.f32 %v1229, %v1266
        %v1299 = vadd.f32 %v1230, %v1267
        %v1300 = vadd.f32 %v1231, %v1268
        %v1301 = vadd.f32 %v1232, %v1269
        %v1302 = vadd.f32 %v1233, %v1270
        %v1303 = vadd.f32 %v1234, %v1271
        %v1304 = vadd.f32 %v1235, %v1272
        %v1305 = vadd.f32 %v1236, %v1273
        %v1306 = vadd.f32 %v1237, %v1274
        %v1307 = vadd.f32 %v1238, %v1275
        %v1308 = vadd.f32 %v1239, %v1276
        %v1309 = vadd.f32 %v1240, %v1277
        %v1310 = vadd.f32 %v1241, %v1278
        %v1311 = vadd.f32 %v1242, %v1279
        %v1312 = vadd.f32 %v1243, %v1280
        %v1313 = vld [vmem:[#allocation2 + $0x9] sm:$0xff]
        %v1314 = vld [vmem:[#allocation2 + $0x11] sm:$0xff]
        %v1315 = vld [vmem:[#allocation2 + $0x29] sm:$0xff]
        %v1316 = vld [vmem:[#allocation2 + $0x31] sm:$0xff]
        %v1317 = vld [vmem:[#allocation2 + $0x49] sm:$0xff]
        %v1318 = vld [vmem:[#allocation2 + $0x51] sm:$0xff]
        %v1319 = vld [vmem:[#allocation2 + $0x69] sm:$0xff]
        %v1320 = vld [vmem:[#allocation2 + $0x71] sm:$0xff]
        %v1321 = vld [vmem:[#allocation2 + $0x89] sm:$0xff]
        %v1322 = vld [vmem:[#allocation2 + $0x91] sm:$0xff]
        %v1323 = vld [vmem:[#allocation2 + $0xa9] sm:$0xff]
        %v1324 = vld [vmem:[#allocation2 + $0xb1] sm:$0xff]
        %v1325 = vld [vmem:[#allocation2 + $0xc9] sm:$0xff]
        %v1326 = vld [vmem:[#allocation2 + $0xd1] sm:$0xff]
        %v1327 = vld [vmem:[#allocation2 + $0xe9] sm:$0xff]
        %v1328 = vld [vmem:[#allocation2 + $0xf1] sm:$0xff]
        %v1329 = vld [vmem:[#allocation2 + $0x109] sm:$0xff]
        %v1330 = vld [vmem:[#allocation2 + $0x111] sm:$0xff]
        %v1331 = vld [vmem:[#allocation2 + $0x129] sm:$0xff]
        %v1332 = vld [vmem:[#allocation2 + $0x131] sm:$0xff]
        %v1333 = vld [vmem:[#allocation2 + $0x149] sm:$0xff]
        %v1334 = vld [vmem:[#allocation2 + $0x151] sm:$0xff]
        %v1335 = vld [vmem:[#allocation2 + $0x169] sm:$0xff]
        %v1336 = vld [vmem:[#allocation2 + $0x171] sm:$0xff]
        %v1337 = vld [vmem:[#allocation2 + $0x189] sm:$0xff]
        %v1338 = vld [vmem:[#allocation2 + $0x191] sm:$0xff]
        %v1339 = vld [vmem:[#allocation2 + $0x1a9] sm:$0xff]
        %v1340 = vld [vmem:[#allocation2 + $0x1b1] sm:$0xff]
        %v1341 = vld [vmem:[#allocation2 + $0x1c9] sm:$0xff]
        %v1342 = vld [vmem:[#allocation2 + $0x1d1] sm:$0xff]
        %v1343 = vld [vmem:[#allocation2 + $0x1e9] sm:$0xff]
        %v1344 = vld [vmem:[#allocation2 + $0x1f1] sm:$0xff]
        %v1345 = vld [vmem:[#allocation2 + $0x209] sm:$0xff]
        %v1346 = vld [vmem:[#allocation2 + $0x211] sm:$0xff]
        %v1347 = vld [vmem:[#allocation2 + $0x229] sm:$0xff]
        %v1348 = vld [vmem:[#allocation2 + $0x231] sm:$0xff]
        %v1349 = vld [vmem:[%s3 + $0x2] sm:$0x1]
        %v1350 = vlaneseq
        %v1351 = vshrl.u32 %v1350, 7
        %v1352 = vsub.s32 0, %v1351
        %v1353 = vrot.slane %v1349, %v1352
        %v1354 = vmul.f32 %v1313, %v1353
        %v1355 = vmul.f32 %v1314, %v1353
        %v1356 = vmul.f32 %v1315, %v1353
        %v1357 = vmul.f32 %v1316, %v1353
        %v1358 = vmul.f32 %v1317, %v1353
        %v1359 = vmul.f32 %v1318, %v1353
        %v1360 = vmul.f32 %v1319, %v1353
        %v1361 = vmul.f32 %v1320, %v1353
        %v1362 = vmul.f32 %v1321, %v1353
        %v1363 = vmul.f32 %v1322, %v1353
        %v1364 = vmul.f32 %v1323, %v1353
        %v1365 = vmul.f32 %v1324, %v1353
        %v1366 = vmul.f32 %v1325, %v1353
        %v1367 = vmul.f32 %v1326, %v1353
        %v1368 = vmul.f32 %v1327, %v1353
        %v1369 = vmul.f32 %v1328, %v1353
        %v1370 = vmul.f32 %v1329, %v1353
        %v1371 = vmul.f32 %v1330, %v1353
        %v1372 = vmul.f32 %v1331, %v1353
        %v1373 = vmul.f32 %v1332, %v1353
        %v1374 = vmul.f32 %v1333, %v1353
        %v1375 = vmul.f32 %v1334, %v1353
        %v1376 = vmul.f32 %v1335, %v1353
        %v1377 = vmul.f32 %v1336, %v1353
        %v1378 = vmul.f32 %v1337, %v1353
        %v1379 = vmul.f32 %v1338, %v1353
        %v1380 = vmul.f32 %v1339, %v1353
        %v1381 = vmul.f32 %v1340, %v1353
        %v1382 = vmul.f32 %v1341, %v1353
        %v1383 = vmul.f32 %v1342, %v1353
        %v1384 = vmul.f32 %v1343, %v1353
        %v1385 = vmul.f32 %v1344, %v1353
        %v1386 = vadd.f32 %v1281, %v1354
        %v1387 = vadd.f32 %v1282, %v1355
        %v1388 = vadd.f32 %v1283, %v1356
        %v1389 = vadd.f32 %v1284, %v1357
        %v1390 = vadd.f32 %v1285, %v1358
        %v1391 = vadd.f32 %v1286, %v1359
        %v1392 = vadd.f32 %v1287, %v1360
        %v1393 = vadd.f32 %v1288, %v1361
        %v1394 = vadd.f32 %v1289, %v1362
        %v1395 = vadd.f32 %v1290, %v1363
        %v1396 = vadd.f32 %v1291, %v1364
        %v1397 = vadd.f32 %v1292, %v1365
        %v1398 = vadd.f32 %v1293, %v1366
        %v1399 = vadd.f32 %v1294, %v1367
        %v1400 = vadd.f32 %v1295, %v1368
        %v1401 = vadd.f32 %v1296, %v1369
        %v1402 = vadd.f32 %v1297, %v1370
        %v1403 = vadd.f32 %v1298, %v1371
        %v1404 = vadd.f32 %v1299, %v1372
        %v1405 = vadd.f32 %v1300, %v1373
        %v1406 = vadd.f32 %v1301, %v1374
        %v1407 = vadd.f32 %v1302, %v1375
        %v1408 = vadd.f32 %v1303, %v1376
        %v1409 = vadd.f32 %v1304, %v1377
        %v1410 = vadd.f32 %v1305, %v1378
        %v1411 = vadd.f32 %v1306, %v1379
        %v1412 = vadd.f32 %v1307, %v1380
        %v1413 = vadd.f32 %v1308, %v1381
        %v1414 = vadd.f32 %v1309, %v1382
        %v1415 = vadd.f32 %v1310, %v1383
        %v1416 = vadd.f32 %v1311, %v1384
        %v1417 = vadd.f32 %v1312, %v1385
        %v1418 = vld [vmem:[%s930 + $0x2] sm:$0x1]
        %v1419 = vlaneseq
        %v1420 = vshrl.u32 %v1419, 7
        %v1421 = vsub.s32 0, %v1420
        %v1422 = vrot.slane %v1418, %v1421
        %v1423 = vmul.f32 %v1315, %v1422
        %v1424 = vmul.f32 %v1316, %v1422
        %v1425 = vmul.f32 %v1317, %v1422
        %v1426 = vmul.f32 %v1318, %v1422
        %v1427 = vmul.f32 %v1319, %v1422
        %v1428 = vmul.f32 %v1320, %v1422
        %v1429 = vmul.f32 %v1321, %v1422
        %v1430 = vmul.f32 %v1322, %v1422
        %v1431 = vmul.f32 %v1323, %v1422
        %v1432 = vmul.f32 %v1324, %v1422
        %v1433 = vmul.f32 %v1325, %v1422
        %v1434 = vmul.f32 %v1326, %v1422
        %v1435 = vmul.f32 %v1327, %v1422
        %v1436 = vmul.f32 %v1328, %v1422
        %v1437 = vmul.f32 %v1329, %v1422
        %v1438 = vmul.f32 %v1330, %v1422
        %v1439 = vmul.f32 %v1331, %v1422
        %v1440 = vmul.f32 %v1332, %v1422
        %v1441 = vmul.f32 %v1333, %v1422
        %v1442 = vmul.f32 %v1334, %v1422
        %v1443 = vmul.f32 %v1335, %v1422
        %v1444 = vmul.f32 %v1336, %v1422
        %v1445 = vmul.f32 %v1337, %v1422
        %v1446 = vmul.f32 %v1338, %v1422
        %v1447 = vmul.f32 %v1339, %v1422
        %v1448 = vmul.f32 %v1340, %v1422
        %v1449 = vmul.f32 %v1341, %v1422
        %v1450 = vmul.f32 %v1342, %v1422
        %v1451 = vmul.f32 %v1343, %v1422
        %v1452 = vmul.f32 %v1344, %v1422
        %v1453 = vmul.f32 %v1345, %v1422
        %v1454 = vmul.f32 %v1346, %v1422
        %v1455 = vadd.f32 %v1386, %v1423
        %v1456 = vadd.f32 %v1387, %v1424
        %v1457 = vadd.f32 %v1388, %v1425
        %v1458 = vadd.f32 %v1389, %v1426
        %v1459 = vadd.f32 %v1390, %v1427
        %v1460 = vadd.f32 %v1391, %v1428
        %v1461 = vadd.f32 %v1392, %v1429
        %v1462 = vadd.f32 %v1393, %v1430
        %v1463 = vadd.f32 %v1394, %v1431
        %v1464 = vadd.f32 %v1395, %v1432
        %v1465 = vadd.f32 %v1396, %v1433
        %v1466 = vadd.f32 %v1397, %v1434
        %v1467 = vadd.f32 %v1398, %v1435
        %v1468 = vadd.f32 %v1399, %v1436
        %v1469 = vadd.f32 %v1400, %v1437
        %v1470 = vadd.f32 %v1401, %v1438
        %v1471 = vadd.f32 %v1402, %v1439
        %v1472 = vadd.f32 %v1403, %v1440
        %v1473 = vadd.f32 %v1404, %v1441
        %v1474 = vadd.f32 %v1405, %v1442
        %v1475 = vadd.f32 %v1406, %v1443
        %v1476 = vadd.f32 %v1407, %v1444
        %v1477 = vadd.f32 %v1408, %v1445
        %v1478 = vadd.f32 %v1409, %v1446
        %v1479 = vadd.f32 %v1410, %v1447
        %v1480 = vadd.f32 %v1411, %v1448
        %v1481 = vadd.f32 %v1412, %v1449
        %v1482 = vadd.f32 %v1413, %v1450
        %v1483 = vadd.f32 %v1414, %v1451
        %v1484 = vadd.f32 %v1415, %v1452
        %v1485 = vadd.f32 %v1416, %v1453
        %v1486 = vadd.f32 %v1417, %v1454
        %v1487 = vld [vmem:[%s1000 + $0x2] sm:$0x1]
        %v1488 = vlaneseq
        %v1489 = vshrl.u32 %v1488, 7
        %v1490 = vsub.s32 0, %v1489
        %v1491 = vrot.slane %v1487, %v1490
        %v1492 = vmul.f32 %v1317, %v1491
        %v1493 = vmul.f32 %v1318, %v1491
        %v1494 = vmul.f32 %v1319, %v1491
        %v1495 = vmul.f32 %v1320, %v1491
        %v1496 = vmul.f32 %v1321, %v1491
        %v1497 = vmul.f32 %v1322, %v1491
        %v1498 = vmul.f32 %v1323, %v1491
        %v1499 = vmul.f32 %v1324, %v1491
        %v1500 = vmul.f32 %v1325, %v1491
        %v1501 = vmul.f32 %v1326, %v1491
        %v1502 = vmul.f32 %v1327, %v1491
        %v1503 = vmul.f32 %v1328, %v1491
        %v1504 = vmul.f32 %v1329, %v1491
        %v1505 = vmul.f32 %v1330, %v1491
        %v1506 = vmul.f32 %v1331, %v1491
        %v1507 = vmul.f32 %v1332, %v1491
        %v1508 = vmul.f32 %v1333, %v1491
        %v1509 = vmul.f32 %v1334, %v1491
        %v1510 = vmul.f32 %v1335, %v1491
        %v1511 = vmul.f32 %v1336, %v1491
        %v1512 = vmul.f32 %v1337, %v1491
        %v1513 = vmul.f32 %v1338, %v1491
        %v1514 = vmul.f32 %v1339, %v1491
        %v1515 = vmul.f32 %v1340, %v1491
        %v1516 = vmul.f32 %v1341, %v1491
        %v1517 = vmul.f32 %v1342, %v1491
        %v1518 = vmul.f32 %v1343, %v1491
        %v1519 = vmul.f32 %v1344, %v1491
        %v1520 = vmul.f32 %v1345, %v1491
        %v1521 = vmul.f32 %v1346, %v1491
        %v1522 = vmul.f32 %v1347, %v1491
        %v1523 = vmul.f32 %v1348, %v1491
        %v1524 = vadd.f32 %v1455, %v1492
        %v1525 = vadd.f32 %v1456, %v1493
        %v1526 = vadd.f32 %v1457, %v1494
        %v1527 = vadd.f32 %v1458, %v1495
        %v1528 = vadd.f32 %v1459, %v1496
        %v1529 = vadd.f32 %v1460, %v1497
        %v1530 = vadd.f32 %v1461, %v1498
        %v1531 = vadd.f32 %v1462, %v1499
        %v1532 = vadd.f32 %v1463, %v1500
        %v1533 = vadd.f32 %v1464, %v1501
        %v1534 = vadd.f32 %v1465, %v1502
        %v1535 = vadd.f32 %v1466, %v1503
        %v1536 = vadd.f32 %v1467, %v1504
        %v1537 = vadd.f32 %v1468, %v1505
        %v1538 = vadd.f32 %v1469, %v1506
        %v1539 = vadd.f32 %v1470, %v1507
        %v1540 = vadd.f32 %v1471, %v1508
        %v1541 = vadd.f32 %v1472, %v1509
        %v1542 = vadd.f32 %v1473, %v1510
        %v1543 = vadd.f32 %v1474, %v1511
        %v1544 = vadd.f32 %v1475, %v1512
        %v1545 = vadd.f32 %v1476, %v1513
        %v1546 = vadd.f32 %v1477, %v1514
        %v1547 = vadd.f32 %v1478, %v1515
        %v1548 = vadd.f32 %v1479, %v1516
        %v1549 = vadd.f32 %v1480, %v1517
        %v1550 = vadd.f32 %v1481, %v1518
        %v1551 = vadd.f32 %v1482, %v1519
        %v1552 = vadd.f32 %v1483, %v1520
        %v1553 = vadd.f32 %v1484, %v1521
        %v1554 = vadd.f32 %v1485, %v1522
        %v1555 = vadd.f32 %v1486, %v1523
        %v1556 = vld [vmem:[%s4] sm:$0x1]
        %v1558 = vlaneseq
        %v1559 = vshrl.u32 %v1558, 7
        %v1560 = vsub.s32 0, %v1559
        %v1561 = vrot.slane %v1556, %v1560
        %v1563 = vadd.f32 %v1524, %v1561
        %v1564 = vadd.f32 %v1525, %v1561
        %v1565 = vadd.f32 %v1526, %v1561
        %v1566 = vadd.f32 %v1527, %v1561
        %v1567 = vadd.f32 %v1528, %v1561
        %v1568 = vadd.f32 %v1529, %v1561
        %v1569 = vadd.f32 %v1530, %v1561
        %v1570 = vadd.f32 %v1531, %v1561
        %v1571 = vadd.f32 %v1532, %v1561
        %v1572 = vadd.f32 %v1533, %v1561
        %v1573 = vadd.f32 %v1534, %v1561
        %v1574 = vadd.f32 %v1535, %v1561
        %v1575 = vadd.f32 %v1536, %v1561
        %v1576 = vadd.f32 %v1537, %v1561
        %v1577 = vadd.f32 %v1538, %v1561
        %v1578 = vadd.f32 %v1539, %v1561
        %v1579 = vadd.f32 %v1540, %v1561
        %v1580 = vadd.f32 %v1541, %v1561
        %v1581 = vadd.f32 %v1542, %v1561
        %v1582 = vadd.f32 %v1543, %v1561
        %v1583 = vadd.f32 %v1544, %v1561
        %v1584 = vadd.f32 %v1545, %v1561
        %v1585 = vadd.f32 %v1546, %v1561
        %v1586 = vadd.f32 %v1547, %v1561
        %v1587 = vadd.f32 %v1548, %v1561
        %v1588 = vadd.f32 %v1549, %v1561
        %v1589 = vadd.f32 %v1550, %v1561
        %v1590 = vadd.f32 %v1551, %v1561
        %v1591 = vadd.f32 %v1552, %v1561
        %v1592 = vadd.f32 %v1553, %v1561
        %v1593 = vadd.f32 %v1554, %v1561
        %v1594 = vadd.f32 %v1555, %v1561
        %v1595 = vmax.f32 %v1563, 0.0
        %v1596 = vmax.f32 %v1564, 0.0
        %v1597 = vmax.f32 %v1565, 0.0
        %v1598 = vmax.f32 %v1566, 0.0
        %v1599 = vmax.f32 %v1567, 0.0
        %v1600 = vmax.f32 %v1568, 0.0
        %v1601 = vmax.f32 %v1569, 0.0
        %v1602 = vmax.f32 %v1570, 0.0
        %v1603 = vmax.f32 %v1571, 0.0
        %v1604 = vmax.f32 %v1572, 0.0
        %v1605 = vmax.f32 %v1573, 0.0
        %v1606 = vmax.f32 %v1574, 0.0
        %v1607 = vmax.f32 %v1575, 0.0
        %v1608 = vmax.f32 %v1576, 0.0
        %v1609 = vmax.f32 %v1577, 0.0
        %v1610 = vmax.f32 %v1578, 0.0
        %v1611 = vmax.f32 %v1579, 0.0
        %v1612 = vmax.f32 %v1580, 0.0
        %v1613 = vmax.f32 %v1581, 0.0
        %v1614 = vmax.f32 %v1582, 0.0
        %v1615 = vmax.f32 %v1583, 0.0
        %v1616 = vmax.f32 %v1584, 0.0
        %v1617 = vmax.f32 %v1585, 0.0
        %v1618 = vmax.f32 %v1586, 0.0
        %v1619 = vmax.f32 %v1587, 0.0
        %v1620 = vmax.f32 %v1588, 0.0
        %v1621 = vmax.f32 %v1589, 0.0
        %v1622 = vmax.f32 %v1590, 0.0
        %v1623 = vmax.f32 %v1591, 0.0
        %v1624 = vmax.f32 %v1592, 0.0
        %v1625 = vmax.f32 %v1593, 0.0
        %v1626 = vmax.f32 %v1594, 0.0
        %v1627 = vmin.f32 %v1595, 6.0
        %v1628 = vmin.f32 %v1596, 6.0
        %v1629 = vmin.f32 %v1597, 6.0
        %v1630 = vmin.f32 %v1598, 6.0
        %v1631 = vmin.f32 %v1599, 6.0
        %v1632 = vmin.f32 %v1600, 6.0
        %v1633 = vmin.f32 %v1601, 6.0
        %v1634 = vmin.f32 %v1602, 6.0
        %v1635 = vmin.f32 %v1603, 6.0
        %v1636 = vmin.f32 %v1604, 6.0
        %v1637 = vmin.f32 %v1605, 6.0
        %v1638 = vmin.f32 %v1606, 6.0
        %v1639 = vmin.f32 %v1607, 6.0
        %v1640 = vmin.f32 %v1608, 6.0
        %v1641 = vmin.f32 %v1609, 6.0
        %v1642 = vmin.f32 %v1610, 6.0
        %v1643 = vmin.f32 %v1611, 6.0
        %v1644 = vmin.f32 %v1612, 6.0
        %v1645 = vmin.f32 %v1613, 6.0
        %v1646 = vmin.f32 %v1614, 6.0
        %v1647 = vmin.f32 %v1615, 6.0
        %v1648 = vmin.f32 %v1616, 6.0
        %v1649 = vmin.f32 %v1617, 6.0
        %v1650 = vmin.f32 %v1618, 6.0
        %v1651 = vmin.f32 %v1619, 6.0
        %v1652 = vmin.f32 %v1620, 6.0
        %v1653 = vmin.f32 %v1621, 6.0
        %v1654 = vmin.f32 %v1622, 6.0
        %v1655 = vmin.f32 %v1623, 6.0
        %v1656 = vmin.f32 %v1624, 6.0
        %v1657 = vmin.f32 %v1625, 6.0
        %v1658 = vmin.f32 %v1626, 6.0
        %v1659 = vpack.c.bf16 %v1628, %v1627
        %v1660 = vpack.c.bf16 %v1630, %v1629
        %v1661 = vpack.c.bf16 %v1632, %v1631
        %v1662 = vpack.c.bf16 %v1634, %v1633
        %v1663 = vpack.c.bf16 %v1636, %v1635
        %v1664 = vpack.c.bf16 %v1638, %v1637
        %v1665 = vpack.c.bf16 %v1640, %v1639
        %v1666 = vpack.c.bf16 %v1642, %v1641
        %v1667 = vpack.c.bf16 %v1644, %v1643
        %v1668 = vpack.c.bf16 %v1646, %v1645
        %v1669 = vpack.c.bf16 %v1648, %v1647
        %v1670 = vpack.c.bf16 %v1650, %v1649
        %v1671 = vpack.c.bf16 %v1652, %v1651
        %v1672 = vpack.c.bf16 %v1654, %v1653
        %v1673 = vpack.c.bf16 %v1656, %v1655
        %v1674 = vpack.c.bf16 %v1658, %v1657
        %v1675 = vld [vmem:[%s5] sm:$0xf]
        %v1676 = vld [vmem:[%s6] sm:$0xff]
        %1678 = vset.pattern.permute.xlu0 0
        %1679 = vperm.xlu0 %1678, %v1676
        %v1680 = vpop.permute.xlu0 %1679
        %v1683 = vsel %vm738, %v1675, 0
        %v1686 = vsel %vm738, %v1659, 0
        %v1689 = vsel %vm738, %v1660, 0
        %v1692 = vsel %vm738, %v1661, 0
        %v1695 = vsel %vm738, %v1662, 0
        %v1698 = vsel %vm738, %v1663, 0
        %v1701 = vsel %vm738, %v1664, 0
        %v1704 = vsel %vm738, %v1665, 0
        %v1707 = vsel %vm738, %v1666, 0
        %v1710 = vsel %vm738, %v1667, 0
        %v1713 = vsel %vm738, %v1668, 0
        %v1716 = vsel %vm738, %v1669, 0
        %v1719 = vsel %vm738, %v1670, 0
        %v1722 = vsel %vm738, %v1671, 0
        %v1725 = vsel %vm738, %v1672, 0
        %v1728 = vsel %vm738, %v1673, 0
        %v1731 = vsel %vm738, %v1674, 0
        %1733 = vmatprep.subr.bf16.mxu0 0
        %1734 = vmatpush1.bf16.xpose.msra.mxu0 %v1686
        %1735 = vmatprep.subr.bf16.mxu0 0
        %1736 = vmatpush1.bf16.xpose.msra.mxu0 %v1689
        %1737 = vmatprep.subr.bf16.mxu0 0
        %1738 = vmatpush1.bf16.xpose.msra.mxu0 %v1692
        %1739 = vmatprep.subr.bf16.mxu0 0
        %1740 = vmatpush1.bf16.xpose.msra.mxu0 %v1695
        %1741 = vmatprep.subr.bf16.mxu0 0
        %1742 = vmatpush1.bf16.xpose.msra.mxu0 %v1698
        %1743 = vmatprep.subr.bf16.mxu0 0
        %1744 = vmatpush1.bf16.xpose.msra.mxu0 %v1701
        %1745 = vmatprep.subr.bf16.mxu0 0
        %1746 = vmatpush1.bf16.xpose.msra.mxu0 %v1704
        %1747 = vmatprep.subr.bf16.mxu0 0
        %1748 = vmatpush1.bf16.xpose.msra.mxu0 %v1707
        %1749 = vmatprep.subr.bf16.mxu0 0
        %1750 = vmatpush1.bf16.xpose.msra.mxu0 %v1710
        %1751 = vmatprep.subr.bf16.mxu0 0
        %1752 = vmatpush1.bf16.xpose.msra.mxu0 %v1713
        %1753 = vmatprep.subr.bf16.mxu0 0
        %1754 = vmatpush1.bf16.xpose.msra.mxu0 %v1716
        %1755 = vmatprep.subr.bf16.mxu0 0
        %1756 = vmatpush1.bf16.xpose.msra.mxu0 %v1719
        %1757 = vmatprep.subr.bf16.mxu0 0
        %1758 = vmatpush1.bf16.xpose.msra.mxu0 %v1722
        %1759 = vmatprep.subr.bf16.mxu0 0
        %1760 = vmatpush1.bf16.xpose.msra.mxu0 %v1725
        %1761 = vmatprep.subr.bf16.mxu0 0
        %1762 = vmatpush1.bf16.xpose.msra.mxu0 %v1728
        %1763 = vmatprep.subr.bf16.mxu0 0
        %1764 = vmatpush1.bf16.xpose.msra.mxu0 %v1731
        %1765 = vmatprep.mubr.bf16.mxu0 0
        %1766 = vmatmul.mubr.bf16.gmra.mrb[0].mxu0 %v1683
        %v1767 = vpop.f32.mrb[0].mxu0
        %v1768 = vadd.f32 %v1680, %v1767
        %v1769 = vpop.f32.mrb[0].mxu0
        %v1770 = vadd.f32 %v1680, %v1769
        %v1771 = vpop.f32.mrb[0].mxu0
        %v1772 = vpop.f32.mrb[0].mxu0
        %1773 = vdwg.mxu0
        %v1774 = vunpack.c.l.bf16 %v298
        %v1775 = vunpack.c.l.bf16 %v299
        %v1776 = vunpack.c.l.bf16 %v300
        %v1777 = vunpack.c.l.bf16 %v301
        %v1778 = vunpack.c.l.bf16 %v302
        %v1779 = vunpack.c.l.bf16 %v303
        %v1780 = vunpack.c.l.bf16 %v304
        %v1781 = vunpack.c.l.bf16 %v305
        %v1782 = vunpack.c.l.bf16 %v306
        %v1783 = vunpack.c.l.bf16 %v307
        %v1784 = vunpack.c.l.bf16 %v308
        %v1785 = vunpack.c.l.bf16 %v309
        %v1786 = vunpack.c.l.bf16 %v310
        %v1787 = vunpack.c.l.bf16 %v311
        %v1788 = vunpack.c.l.bf16 %v312
        %v1789 = vunpack.c.l.bf16 %v313
        %v1790 = vunpack.c.l.bf16 %v314
        %v1791 = vunpack.c.l.bf16 %v315
        %v1792 = vunpack.c.l.bf16 %v316
        %v1793 = vunpack.c.l.bf16 %v317
        %v1794 = vunpack.c.l.bf16 %v318
        %v1795 = vunpack.c.l.bf16 %v319
        %v1796 = vunpack.c.l.bf16 %v320
        %v1797 = vunpack.c.l.bf16 %v321
        %v1798 = vunpack.c.l.bf16 %v322
        %v1799 = vunpack.c.l.bf16 %v323
        %v1800 = vunpack.c.l.bf16 %v324
        %v1801 = vunpack.c.l.bf16 %v325
        %v1802 = vunpack.c.l.bf16 %v326
        %v1803 = vunpack.c.l.bf16 %v327
        %v1804 = vunpack.c.l.bf16 %v328
        %v1805 = vunpack.c.l.bf16 %v329
        %1806 = vxpose.xlu0.b32.start [1/16] %v1774, 128
        %1807 = vxpose.xlu0.b32.cont [2/16] %v1775, 128
        %1808 = vxpose.xlu0.b32.cont [3/16] %v1776, 128
        %1809 = vxpose.xlu0.b32.cont [4/16] %v1777, 128
        %1810 = vxpose.xlu0.b32.cont [5/16] %v1778, 128
        %1811 = vxpose.xlu0.b32.cont [6/16] %v1779, 128
        %1812 = vxpose.xlu0.b32.cont [7/16] %v1780, 128
        %1813 = vxpose.xlu0.b32.cont [8/16] %v1781, 128
        %1814 = vxpose.xlu0.b32.cont [9/16] %v1782, 128
        %1815 = vxpose.xlu0.b32.cont [10/16] %v1783, 128
        %1816 = vxpose.xlu0.b32.cont [11/16] %v1784, 128
        %1817 = vxpose.xlu0.b32.cont [12/16] %v1785, 128
        %1818 = vxpose.xlu0.b32.cont [13/16] %v1786, 128
        %1819 = vxpose.xlu0.b32.cont [14/16] %v1787, 128
        %1820 = vxpose.xlu0.b32.cont [15/16] %v1788, 128
        %1821 = vxpose.xlu0.b32.end [16/16] %v1789, 128
        %v1822 = vpop.trf.xlu0
        %v1823 = vpop.trf.xlu0
        %v1824 = vpop.trf.xlu0
        %v1825 = vpop.trf.xlu0
        %v1826 = vpop.trf.xlu0
        %v1827 = vpop.trf.xlu0
        %v1828 = vpop.trf.xlu0
        %v1829 = vpop.trf.xlu0
        %v1830 = vpop.trf.xlu0
        %v1831 = vpop.trf.xlu0
        %v1832 = vpop.trf.xlu0
        %v1833 = vpop.trf.xlu0
        %v1834 = vpop.trf.xlu0
        %v1835 = vpop.trf.xlu0
        %v1836 = vpop.trf.xlu0
        %v1837 = vpop.trf.xlu0
        %1838 = vxpose.xlu0.b32.start [1/16] %v1790, 128
        %1839 = vxpose.xlu0.b32.cont [2/16] %v1791, 128
        %1840 = vxpose.xlu0.b32.cont [3/16] %v1792, 128
        %1841 = vxpose.xlu0.b32.cont [4/16] %v1793, 128
        %1842 = vxpose.xlu0.b32.cont [5/16] %v1794, 128
        %1843 = vxpose.xlu0.b32.cont [6/16] %v1795, 128
        %1844 = vxpose.xlu0.b32.cont [7/16] %v1796, 128
        %1845 = vxpose.xlu0.b32.cont [8/16] %v1797, 128
        %1846 = vxpose.xlu0.b32.cont [9/16] %v1798, 128
        %1847 = vxpose.xlu0.b32.cont [10/16] %v1799, 128
        %1848 = vxpose.xlu0.b32.cont [11/16] %v1800, 128
        %1849 = vxpose.xlu0.b32.cont [12/16] %v1801, 128
        %1850 = vxpose.xlu0.b32.cont [13/16] %v1802, 128
        %1851 = vxpose.xlu0.b32.cont [14/16] %v1803, 128
        %1852 = vxpose.xlu0.b32.cont [15/16] %v1804, 128
        %1853 = vxpose.xlu0.b32.end [16/16] %v1805, 128
        %v1854 = vpop.trf.xlu0
        %v1855 = vpop.trf.xlu0
        %v1856 = vpop.trf.xlu0
        %v1857 = vpop.trf.xlu0
        %v1858 = vpop.trf.xlu0
        %v1859 = vpop.trf.xlu0
        %v1860 = vpop.trf.xlu0
        %v1861 = vpop.trf.xlu0
        %v1862 = vpop.trf.xlu0
        %v1863 = vpop.trf.xlu0
        %v1864 = vpop.trf.xlu0
        %v1865 = vpop.trf.xlu0
        %v1866 = vpop.trf.xlu0
        %v1867 = vpop.trf.xlu0
        %v1868 = vpop.trf.xlu0
        %v1869 = vpop.trf.xlu0
        %v1870 = vadd.f32 %v1768, %v1822
        %v1871 = vadd.f32 %v1770, %v1854
        %1872 = vst [vmem:[%s285] sm:$0xff] %v1870
        %1873 = vst [vmem:[%s285 + $0x8] sm:$0xff] %v1871
        %s1874 = sand.u32 %s195, 1
        %s1875 = scalar_lea.sflag [#allocation4], %s1874
        %s1876 = sand.u32 %s195, 1
        %s1877 = smul.addr %s1876, 16
        %s1878 = scalar_lea.vmem [#allocation3], %s1877
        // Predicated region
        $region53: #{tpu_custom_call.1} parent=47 // pred_check
          %p1879 = pneg %p205
        $region54: #{tpu_custom_call.1} parent=47 // pred_check_branch
          %1881 = sbr.rel (%p1879) target = $region56
        $region55: #{tpu_custom_call.1} parent=47 // pred_region
          %s1883 = ssub.s32 256, 256
          %1884 = vsyncadd %s1875, %s1883
          %s1885 = smul.addr %s26, 2
          %s1886 = smul.addr %s25, 2
          %s1887 = sadd.s32 %s1885, %s1886
          %s1888 = smul.addr %s1887, 128
          %s1889 = scalar_lea.hbm %s7, %s1888
          %s1891 = sshll.u32 %s1878, 4
          %s1892 = int_to_ptr.vmem [resolvable:$true] %s1891
          %1894 = dma.vmem_to_hbm [thread:$0]  %s1892, 256, %s1889, %s1875
        $region56: #{tpu_custom_call.1} parent=47 // pred_fallthru
          _
      $region48: #{tpu_custom_call.1} parent=5 // pred_fallthru
        _
      %p1895 = scmp.le.s32.totalorder 2, %s16
      // Predicated region
      $region57: #{tpu_custom_call.1} parent=5 // pred_check
        %p1896 = pneg %p1895
      $region58: #{tpu_custom_call.1} parent=5 // pred_check_branch
        %1898 = sbr.rel (%p1896) target = $region60
      $region59: #{tpu_custom_call.1} parent=5 // pred_region
        %s1899 = ssub.s32 %s16, 2
        // Predicated region
        $region61: #{tpu_custom_call.1} parent=59 // pred_check
          %p1900 = pneg %p211
        $region62: #{tpu_custom_call.1} parent=59 // pred_check_branch
          %1902 = sbr.rel (%p1900) target = $region64
        $region63: #{tpu_custom_call.1} parent=59 // pred_region
          %s1903 = sand.u32 %s196, 1
          %s1904 = scalar_lea.sflag [#allocation4], %s1903
          %s1905 = sand.u32 %s196, 1
          %s1906 = smul.addr %s1905, 16
          %s1907 = scalar_lea.vmem [#allocation3], %s1906
          %1908 = dma.done %s1904, 256
        $region64: #{tpu_custom_call.1} parent=59 // pred_fallthru
          _
      $region60: #{tpu_custom_call.1} parent=5 // pred_fallthru
        _
    $region6: #{tpu_custom_call.1} parent=1 // loop_footer
      %s20 = sadd.s32 1, %s16
    $region7: #{tpu_custom_call.1} parent=1 // loop_footer_branch
      %15 = sbr.rel target = $region3
    $region8: #{tpu_custom_call.1} parent=1 // loop_exit
      _
    %1909 = vsyncpa [#allocation4], 1
    %s1910 = scalar_lea.sflag [#allocation4], 1
    %1911 = vsyncpa %s1910, 1

</llo_original>
